<compile_context>
chip_gen: v7x
topology: tpu7x:2x2x1
jax: 0.10.0
libtpu: 0.0.40
codegen_flags: <defaults>
</compile_context>

<pallas_src>
import functools
import math

import jax
import jax.numpy as jnp
from jax import lax
from jax.experimental import pallas as pl
from jax.experimental.pallas import tpu as pltpu

# ------------------------- small model config --------------------------------
IMG_SIZE = 16
PATCH_SIZE = 8
IN_CHANNELS = 4
D_MODEL = 32
N_LAYERS = 2
N_HEADS = 4
N_CLASSES = 10
N_QUBITS = 8
N_PATCHES = (IMG_SIZE // PATCH_SIZE) ** 2      # 4
SEQ_LEN = N_PATCHES + 1                        # 5
D_FF = D_MODEL * 4                             # 128 (== lane width, exploited)
HEAD_DIM = D_MODEL // N_HEADS                  # 8
LANE = 128
HEAD_PAD = LANE                                # head output padded to 128 lanes


# ------------------------- fused forward kernel ------------------------------
def _qvit_kernel(patches_ref, embed_ref, head_ref, layers_ref, o_ref, *,
                 seq_len, n_layers, n_heads, head_dim, n_qubits,
                 d_model, patch_dim, bs_pad):
    f32 = jnp.float32

    def dot(a, b):
        return jnp.dot(a, b, preferred_element_type=f32)

    def dot_t(a, b):   # a @ b.T, transpose folded into the MXU contraction
        return lax.dot_general(a, b, (((1,), (1,)), ((), ())),
                               preferred_element_type=f32)

    def layernorm(v, g, beta):
        mu = jnp.mean(v, axis=-1, keepdims=True)
        var = jnp.mean((v - mu) ** 2, axis=-1, keepdims=True)
        return (v - mu) * lax.rsqrt(var + 1e-5) * g + beta

    # ---- carve the packed parameter slabs (static slices, free) -------------
    nrm_off = patch_dim + bs_pad
    pw = embed_ref[0:patch_dim, :]                       # (CPP, D)
    addbias = embed_ref[patch_dim:nrm_off, :]            # (BSP, D) cls/pos/bias
    ng = embed_ref[nrm_off:nrm_off + 1, :]               # (1, D) final LN gamma
    nb = embed_ref[nrm_off + 1:nrm_off + 2, :]           # (1, D) final LN beta
    hw = head_ref[0:d_model, :]                          # (D, 128) padded head W
    hb = head_ref[d_model:d_model + 1, :]                # (1, 128) padded head b

    # ---- patch embedding + [CLS] + positional embedding as a pure value -----
    x = dot(patches_ref[...], pw) + addbias              # (BSP, D)

    # ---- block-diagonal cross-image bias, built in-kernel from iota ---------
    r = lax.broadcasted_iota(jnp.int32, (bs_pad, bs_pad), 0)
    c = lax.broadcasted_iota(jnp.int32, (bs_pad, bs_pad), 1)
    rb = jnp.zeros_like(r)
    cb = jnp.zeros_like(c)
    for t in range(seq_len, bs_pad, seq_len):            # static unroll
        rb = rb + (r >= t).astype(jnp.int32)
        cb = cb + (c >= t).astype(jnp.int32)
    amask = jnp.where(rb == cb, 0.0, -1e9).astype(f32)   # (BSP, BSP)

    # 0.7 * mean-over-heads * 1/sqrt(head_dim), folded into one scale
    cls_scale = 0.7 / (n_heads * math.sqrt(head_dim))
    ones_r = jnp.ones((1, n_qubits), f32)
    ones_r3 = jnp.full((1, n_qubits), 0.3, f32)

    for layer in range(n_layers):     # static unroll, weights VMEM-resident
        # per-layer 128-lane slab
        wqkv = layers_ref[layer, 0:d_model, :]                       # (D, 128)
        w1 = layers_ref[layer, d_model:2 * d_model, :]               # (D, 128)
        w2t = layers_ref[layer, 2 * d_model:3 * d_model, :]          # (D, 128) = W2^T
        bqkv = layers_ref[layer, 3 * d_model:3 * d_model + 1, :]     # (1, 128)
        bf1 = layers_ref[layer, 3 * d_model + 1:3 * d_model + 2, :]  # (1, 128)
        # per-layer 32-lane params (in the embed slab)
        sb = nrm_off + 2 + layer * (d_model + 6)
        wo = embed_ref[sb:sb + d_model, :]                           # (D, D)
        bo = embed_ref[sb + d_model + 0:sb + d_model + 1, :]
        bf2 = embed_ref[sb + d_model + 1:sb + d_model + 2, :]
        g1 = embed_ref[sb + d_model + 2:sb + d_model + 3, :]
        be1 = embed_ref[sb + d_model + 3:sb + d_model + 4, :]
        g2 = embed_ref[sb + d_model + 4:sb + d_model + 5, :]
        be2 = embed_ref[sb + d_model + 5:sb + d_model + 6, :]

        # ---- fused Q/K/V projection (one lane-dense matmul) ----
        qkv = dot(x, wqkv) + bqkv                                    # (BSP, 128)
        q = qkv[:, 0:d_model]
        k = qkv[:, d_model:2 * d_model]
        v = qkv[:, 2 * d_model:3 * d_model]

        # classical scores: mean over heads == QK^T/(H*sqrt(hd)); K.T on MXU
        cls_scores = dot_t(q, k) * cls_scale                         # (BSP, BSP)

        # quantum entanglement, closed form; row-broadcasts via MXU (no XLU .T)
        xe = jnp.tanh(x[:, 0:n_qubits])                              # (BSP, nq)
        exq = jnp.exp(xe)
        ew = exq * xe
        e_col = jnp.sum(exq, axis=-1, keepdims=True)                 # (BSP, 1)
        s_col = jnp.sum(ew, axis=-1, keepdims=True) * 0.3            # (BSP, 1)
        e_row = dot_t(ones_r, exq)                                   # (1, BSP)
        s_row = dot_t(ones_r3, ew)                                   # (1, BSP)
        z = e_col + e_row                                            # (BSP, BSP)
        combined = (cls_scores + 0.3 * jnp.log(z)
                    - (s_col + s_row) / z + amask)

        # shared (per-image) softmax; cross-image entries underflow to exact 0
        m = jnp.max(combined, axis=-1, keepdims=True)
        e = jnp.exp(combined - m)
        attn = e / jnp.sum(e, axis=-1, keepdims=True)                # (BSP, BSP)

        attended = dot(attn, v)                                      # (BSP, D)
        attn_out = dot(attended, wo) + bo

        # ---- residual + LN + FF (W2 consumed transposed) + residual + LN ----
        x1 = layernorm(x + attn_out, g1, be1)
        h = jnp.maximum(dot(x1, w1) + bf1, 0.0)                      # (BSP, 128)
        ff = dot_t(h, w2t) + bf2                                     # (BSP, D)
        x = layernorm(x1 + ff, g2, be2)

    # final LayerNorm + padded classification head: one lane-dense store
    xn = layernorm(x, ng, nb)
    o_ref[...] = dot(xn, hw) + hb                                    # (BSP, 128)


def _full(shape):
    nd = len(shape)
    return pl.BlockSpec(shape, lambda i, _nd=nd: (0,) * _nd)


@jax.jit
def qvit_forward(x, packed):
    # x: NCHW [B, C, H, W]
    B, C, H, W = x.shape
    p = PATCH_SIZE
    hp, wp = H // p, W // p
    cpp = C * p * p
    bs = B * SEQ_LEN
    bs_pad = -(-bs // 8) * 8                       # pad tokens to sublane tile

    # non-overlapping patch extraction == stride-p conv; flatten order (c,i,j)
    patches = (x.reshape(B, C, hp, p, wp, p)
                .transpose(0, 2, 4, 1, 3, 5)
                .reshape(B, hp * wp, cpp))
    # token-layout patch slab: zero rows at CLS positions and pad rows
    patches_bs = jnp.concatenate(
        [jnp.concatenate([jnp.zeros((B, 1, cpp), jnp.float32), patches],
                         axis=1).reshape(bs, cpp),
         jnp.zeros((bs_pad - bs, cpp), jnp.float32)], axis=0)        # (BSP, CPP)

    kern = functools.partial(
        _qvit_kernel, seq_len=SEQ_LEN, n_layers=N_LAYERS, n_heads=N_HEADS,
        head_dim=HEAD_DIM, n_qubits=N_QUBITS, d_model=D_MODEL,
        patch_dim=cpp, bs_pad=bs_pad)

    args = (patches_bs, packed["embed"], packed["head"], packed["layers"])
    logits_all = pl.pallas_call(
        kern,
        grid=(1,),
        in_specs=[_full(a.shape) for a in args],
        out_specs=pl.BlockSpec((bs_pad, HEAD_PAD), lambda i: (0, 0)),
        out_shape=jax.ShapeDtypeStruct((bs_pad, HEAD_PAD), jnp.float32),
        compiler_params=pltpu.CompilerParams(
            dimension_semantics=("arbitrary",)),
    )(*args)
    # keep the CLS token's logits for each image, drop class padding
    return logits_all[:bs].reshape(B, SEQ_LEN, HEAD_PAD)[:, 0, :N_CLASSES]


# ------------------------- parameters ----------------------------------------
def init_params(key):
    keys = jax.random.split(key, 4 + N_LAYERS)

    def nrm(k, shape, scale=0.02):
        return (scale * jax.random.normal(k, shape)).astype(jnp.float32)

    params = {
        # conv patch-embed weight flattened as (C*p*p, D); bias (1, D)
        # (flatten order (c, kh, kw) — only self-consistent with random init)
        "patch_w": nrm(keys[0], (IN_CHANNELS * PATCH_SIZE * PATCH_SIZE, D_MODEL)),
        "patch_b": jnp.zeros((1, D_MODEL), jnp.float32),
        "cls_token": nrm(keys[1], (1, D_MODEL)),
        "pos_embed": nrm(keys[2], (SEQ_LEN, D_MODEL)),
        "norm_g": jnp.ones((1, D_MODEL), jnp.float32),
        "norm_b": jnp.zeros((1, D_MODEL), jnp.float32),
        "head_w": nrm(keys[3], (D_MODEL, N_CLASSES)),
        "head_b": jnp.zeros((1, N_CLASSES), jnp.float32),
    }
    wq, wk, wv, wo, w1, w2 = [], [], [], [], [], []
    for layer in range(N_LAYERS):
        bk_ = jax.random.split(jax.random.fold_in(keys[3], layer + 1), 6)
        wq.append(nrm(bk_[0], (D_MODEL, D_MODEL)))
        wk.append(nrm(bk_[1], (D_MODEL, D_MODEL)))
        wv.append(nrm(bk_[2], (D_MODEL, D_MODEL)))
        wo.append(nrm(bk_[3], (D_MODEL, D_MODEL)))
        w1.append(nrm(bk_[4], (D_MODEL, D_FF)))
        w2.append(nrm(bk_[5], (D_FF, D_MODEL)))
    L = N_LAYERS
    params.update({
        "wq": jnp.stack(wq), "bq": jnp.zeros((L, 1, D_MODEL), jnp.float32),
        "wk": jnp.stack(wk), "bk": jnp.zeros((L, 1, D_MODEL), jnp.float32),
        "wv": jnp.stack(wv), "bv": jnp.zeros((L, 1, D_MODEL), jnp.float32),
        "wo": jnp.stack(wo), "bo": jnp.zeros((L, 1, D_MODEL), jnp.float32),
        "g1": jnp.ones((L, 1, D_MODEL), jnp.float32),
        "be1": jnp.zeros((L, 1, D_MODEL), jnp.float32),
        "w1": jnp.stack(w1), "bf1": jnp.zeros((L, 1, D_FF), jnp.float32),
        "w2": jnp.stack(w2), "bf2": jnp.zeros((L, 1, D_MODEL), jnp.float32),
        "g2": jnp.ones((L, 1, D_MODEL), jnp.float32),
        "be2": jnp.zeros((L, 1, D_MODEL), jnp.float32),
    })
    return params


def pack_params(p, batch):
    """Pack all parameters into 3 contiguous f32 slabs (done once, off the
    per-call path) so the kernel issues 4 input DMAs instead of ~26."""
    assert D_FF == LANE, "packing assumes d_ff == 128"
    f32 = jnp.float32
    bs = batch * SEQ_LEN
    bs_pad = -(-bs // 8) * 8

    # --- 32-lane slab: patch_w | cls/pos/bias addend | final LN | small per-layer
    per_image = jnp.concatenate(
        [p["cls_token"] + p["pos_embed"][0:1],
         p["patch_b"] + p["pos_embed"][1:SEQ_LEN]], axis=0)          # (S, D)
    addbias = jnp.concatenate(
        [jnp.tile(per_image, (batch, 1)),
         jnp.zeros((bs_pad - bs, D_MODEL), f32)], axis=0)            # (BSP, D)
    rows = [p["patch_w"], addbias, p["norm_g"], p["norm_b"]]
    for l in range(N_LAYERS):
        rows += [p["wo"][l], p["bo"][l], p["bf2"][l], p["g1"][l],
                 p["be1"][l], p["g2"][l], p["be2"][l]]
    embed_slab = jnp.concatenate(rows, axis=0)                       # (350, D)

    # --- 128-lane per-layer slab: [wq|wk|wv] (lane-padded), w1, w2^T, bqkv, bf1
    wqkv = jnp.concatenate([p["wq"], p["wk"], p["wv"]], axis=-1)     # (L, D, 3D)
    wqkv = jnp.pad(wqkv, ((0, 0), (0, 0), (0, LANE - 3 * D_MODEL)))
    w2t = jnp.transpose(p["w2"], (0, 2, 1))                          # (L, D, D_FF)
    bqkv = jnp.pad(jnp.concatenate([p["bq"], p["bk"], p["bv"]], axis=-1),
                   ((0, 0), (0, 0), (0, LANE - 3 * D_MODEL)))        # (L, 1, 128)
    layer_slab = jnp.concatenate([wqkv, p["w1"], w2t, bqkv, p["bf1"]],
                                 axis=1)                             # (L, 98, 128)

    # --- head slab padded to 128 classes for a lane-dense final store
    head_w = jnp.pad(p["head_w"], ((0, 0), (0, HEAD_PAD - N_CLASSES)))
    head_b = jnp.pad(p["head_b"], ((0, 0), (0, HEAD_PAD - N_CLASSES)))
    head_slab = jnp.concatenate([head_w, head_b], axis=0)            # (D+1, 128)

    return {"embed": embed_slab, "layers": layer_slab, "head": head_slab}


if __name__ == "__main__":
    key = jax.random.PRNGKey(0)
    pkey, xkey = jax.random.split(key)
    params = init_params(pkey)
    packed = pack_params(params, batch=2)
    x = jax.random.normal(
        xkey, (2, IN_CHANNELS, IMG_SIZE, IMG_SIZE), dtype=jnp.float32)
    logits = qvit_forward(x, packed)
    jax.block_until_ready(logits)
    assert logits.shape == (2, N_CLASSES)
    assert bool(jnp.all(jnp.isfinite(logits)))
    print("KERNEL_OK")
</pallas_src>

<mosaic_0001>
module attributes {stable_mosaic.version = 11 : i64} {
  func.func @_qvit_kernel(%arg0: i32, %arg1: memref<16x256xf32, #tpu.memory_space<vmem>>, %arg2: memref<350x32xf32, #tpu.memory_space<vmem>>, %arg3: memref<33x128xf32, #tpu.memory_space<vmem>>, %arg4: memref<2x98x128xf32, #tpu.memory_space<vmem>>, %arg5: memref<16x128xf32, #tpu.memory_space<vmem>>) attributes {dimension_semantics = [#tpu.dimension_semantics<arbitrary>], iteration_bounds = array<i64: 1>, scalar_prefetch = 0 : i64, scratch_operands = 0 : i64, tpu.core_type = #tpu.core_type<tc>, window_params = [{pipeline_mode = #tpu.pipeline_mode<synchronous>, transform_indices = @transform_0, window_bounds = array<i64: 16, 256>}, {pipeline_mode = #tpu.pipeline_mode<synchronous>, transform_indices = @transform_1, window_bounds = array<i64: 350, 32>}, {pipeline_mode = #tpu.pipeline_mode<synchronous>, transform_indices = @transform_2, window_bounds = array<i64: 33, 128>}, {pipeline_mode = #tpu.pipeline_mode<synchronous>, transform_indices = @transform_3, window_bounds = array<i64: 2, 98, 128>}, {pipeline_mode = #tpu.pipeline_mode<synchronous>, transform_indices = @transform_4, window_bounds = array<i64: 16, 128>}]} {
    %c0 = arith.constant 0 : index
    %c0_0 = arith.constant 0 : index
    %0 = vector.load %arg2[%c0, %c0_0] : memref<350x32xf32, #tpu.memory_space<vmem>>, vector<256x32xf32>
    %c256 = arith.constant 256 : index
    %c0_1 = arith.constant 0 : index
    %1 = vector.load %arg2[%c256, %c0_1] : memref<350x32xf32, #tpu.memory_space<vmem>>, vector<16x32xf32>
    %c272 = arith.constant 272 : index
    %c0_2 = arith.constant 0 : index
    %2 = vector.load %arg2[%c272, %c0_2] : memref<350x32xf32, #tpu.memory_space<vmem>>, vector<1x32xf32>
    %c273 = arith.constant 273 : index
    %c0_3 = arith.constant 0 : index
    %3 = vector.load %arg2[%c273, %c0_3] : memref<350x32xf32, #tpu.memory_space<vmem>>, vector<1x32xf32>
    %c0_4 = arith.constant 0 : index
    %c0_5 = arith.constant 0 : index
    %4 = vector.load %arg3[%c0_4, %c0_5] : memref<33x128xf32, #tpu.memory_space<vmem>>, vector<32x128xf32>
    %c32 = arith.constant 32 : index
    %c0_6 = arith.constant 0 : index
    %5 = vector.load %arg3[%c32, %c0_6] : memref<33x128xf32, #tpu.memory_space<vmem>>, vector<1x128xf32>
    %c0_7 = arith.constant 0 : index
    %c0_8 = arith.constant 0 : index
    %6 = vector.load %arg1[%c0_7, %c0_8] : memref<16x256xf32, #tpu.memory_space<vmem>>, vector<16x256xf32>
    %cst = arith.constant dense<0.000000e+00> : vector<16x32xf32>
    %7 = tpu.matmul %6, %0, %cst {dimension_numbers = #tpu.dot_dimension_numbers<[1], [0], [0], [1], [0, 0, 1, 1], [], []>} : vector<16x256xf32>, vector<256x32xf32>, vector<16x32xf32> -> vector<16x32xf32>
    %8 = arith.addf %7, %1 : vector<16x32xf32>
    %9 = tpu.iota {dimensions = array<i32: 0>} : vector<16x16xi32>
    %10 = tpu.iota {dimensions = array<i32: 1>} : vector<16x16xi32>
    %c0_i32 = arith.constant 0 : i32
    %11 = vector.broadcast %c0_i32 : i32 to vector<16x16xi32>
    %c0_i32_9 = arith.constant 0 : i32
    %12 = vector.broadcast %c0_i32_9 : i32 to vector<16x16xi32>
    %c5_i32 = arith.constant 5 : i32
    %13 = vector.broadcast %c5_i32 : i32 to vector<16x16xi32>
    %14 = arith.cmpi sge, %9, %13 : vector<16x16xi32>
    %15 = arith.extui %14 : vector<16x16xi1> to vector<16x16xi32>
    %16 = arith.addi %11, %15 : vector<16x16xi32>
    %c5_i32_10 = arith.constant 5 : i32
    %17 = vector.broadcast %c5_i32_10 : i32 to vector<16x16xi32>
    %18 = arith.cmpi sge, %10, %17 : vector<16x16xi32>
    %19 = arith.extui %18 : vector<16x16xi1> to vector<16x16xi32>
    %20 = arith.addi %12, %19 : vector<16x16xi32>
    %c10_i32 = arith.constant 10 : i32
    %21 = vector.broadcast %c10_i32 : i32 to vector<16x16xi32>
    %22 = arith.cmpi sge, %9, %21 : vector<16x16xi32>
    %23 = arith.extui %22 : vector<16x16xi1> to vector<16x16xi32>
    %24 = arith.addi %16, %23 : vector<16x16xi32>
    %c10_i32_11 = arith.constant 10 : i32
    %25 = vector.broadcast %c10_i32_11 : i32 to vector<16x16xi32>
    %26 = arith.cmpi sge, %10, %25 : vector<16x16xi32>
    %27 = arith.extui %26 : vector<16x16xi1> to vector<16x16xi32>
    %28 = arith.addi %20, %27 : vector<16x16xi32>
    %c15_i32 = arith.constant 15 : i32
    %29 = vector.broadcast %c15_i32 : i32 to vector<16x16xi32>
    %30 = arith.cmpi sge, %9, %29 : vector<16x16xi32>
    %31 = arith.extui %30 : vector<16x16xi1> to vector<16x16xi32>
    %32 = arith.addi %24, %31 : vector<16x16xi32>
    %c15_i32_12 = arith.constant 15 : i32
    %33 = vector.broadcast %c15_i32_12 : i32 to vector<16x16xi32>
    %34 = arith.cmpi sge, %10, %33 : vector<16x16xi32>
    %35 = arith.extui %34 : vector<16x16xi1> to vector<16x16xi32>
    %36 = arith.addi %28, %35 : vector<16x16xi32>
    %37 = arith.cmpi eq, %32, %36 : vector<16x16xi32>
    %cst_13 = arith.constant 0.000000e+00 : f32
    %cst_14 = arith.constant -1.000000e+09 : f32
    %38 = vector.broadcast %cst_13 : f32 to vector<16x16xf32>
    %39 = vector.broadcast %cst_14 : f32 to vector<16x16xf32>
    %40 = arith.select %37, %38, %39 : vector<16x16xi1>, vector<16x16xf32>
    %cst_15 = arith.constant 1.000000e+00 : f32
    %41 = vector.broadcast %cst_15 : f32 to vector<1x8xf32>
    %cst_16 = arith.constant 3.000000e-01 : f32
    %42 = vector.broadcast %cst_16 : f32 to vector<1x8xf32>
    %c0_17 = arith.constant 0 : index
    %c0_18 = arith.constant 0 : index
    %c0_19 = arith.constant 0 : index
    %43 = vector.load %arg4[%c0_17, %c0_18, %c0_19] : memref<2x98x128xf32, #tpu.memory_space<vmem>>, vector<1x32x128xf32>
    %44 = vector.shape_cast %43 : vector<1x32x128xf32> to vector<32x128xf32>
    %c0_20 = arith.constant 0 : index
    %c32_21 = arith.constant 32 : index
    %c0_22 = arith.constant 0 : index
    %45 = vector.load %arg4[%c0_20, %c32_21, %c0_22] : memref<2x98x128xf32, #tpu.memory_space<vmem>>, vector<1x32x128xf32>
    %46 = vector.shape_cast %45 : vector<1x32x128xf32> to vector<32x128xf32>
    %c0_23 = arith.constant 0 : index
    %c64 = arith.constant 64 : index
    %c0_24 = arith.constant 0 : index
    %47 = vector.load %arg4[%c0_23, %c64, %c0_24] : memref<2x98x128xf32, #tpu.memory_space<vmem>>, vector<1x32x128xf32>
    %48 = vector.shape_cast %47 : vector<1x32x128xf32> to vector<32x128xf32>
    %c0_25 = arith.constant 0 : index
    %c96 = arith.constant 96 : index
    %c0_26 = arith.constant 0 : index
    %49 = vector.load %arg4[%c0_25, %c96, %c0_26] : memref<2x98x128xf32, #tpu.memory_space<vmem>>, vector<1x1x128xf32>
    %50 = vector.shape_cast %49 : vector<1x1x128xf32> to vector<1x128xf32>
    %c0_27 = arith.constant 0 : index
    %c97 = arith.constant 97 : index
    %c0_28 = arith.constant 0 : index
    %51 = vector.load %arg4[%c0_27, %c97, %c0_28] : memref<2x98x128xf32, #tpu.memory_space<vmem>>, vector<1x1x128xf32>
    %52 = vector.shape_cast %51 : vector<1x1x128xf32> to vector<1x128xf32>
    %c274 = arith.constant 274 : index
    %c0_29 = arith.constant 0 : index
    %53 = vector.load %arg2[%c274, %c0_29] : memref<350x32xf32, #tpu.memory_space<vmem>>, vector<32x32xf32>
    %c306 = arith.constant 306 : index
    %c0_30 = arith.constant 0 : index
    %54 = vector.load %arg2[%c306, %c0_30] : memref<350x32xf32, #tpu.memory_space<vmem>>, vector<1x32xf32>
    %c307 = arith.constant 307 : index
    %c0_31 = arith.constant 0 : index
    %55 = vector.load %arg2[%c307, %c0_31] : memref<350x32xf32, #tpu.memory_space<vmem>>, vector<1x32xf32>
    %c308 = arith.constant 308 : index
    %c0_32 = arith.constant 0 : index
    %56 = vector.load %arg2[%c308, %c0_32] : memref<350x32xf32, #tpu.memory_space<vmem>>, vector<1x32xf32>
    %c309 = arith.constant 309 : index
    %c0_33 = arith.constant 0 : index
    %57 = vector.load %arg2[%c309, %c0_33] : memref<350x32xf32, #tpu.memory_space<vmem>>, vector<1x32xf32>
    %c310 = arith.constant 310 : index
    %c0_34 = arith.constant 0 : index
    %58 = vector.load %arg2[%c310, %c0_34] : memref<350x32xf32, #tpu.memory_space<vmem>>, vector<1x32xf32>
    %c311 = arith.constant 311 : index
    %c0_35 = arith.constant 0 : index
    %59 = vector.load %arg2[%c311, %c0_35] : memref<350x32xf32, #tpu.memory_space<vmem>>, vector<1x32xf32>
    %cst_36 = arith.constant dense<0.000000e+00> : vector<16x128xf32>
    %60 = tpu.matmul %8, %44, %cst_36 {dimension_numbers = #tpu.dot_dimension_numbers<[1], [0], [0], [1], [0, 0, 1, 1], [], []>} : vector<16x32xf32>, vector<32x128xf32>, vector<16x128xf32> -> vector<16x128xf32>
    %61 = vector.broadcast %50 : vector<1x128xf32> to vector<16x128xf32>
    %62 = arith.addf %60, %61 : vector<16x128xf32>
    %63 = vector.extract_strided_slice %62 {offsets = [0, 0], sizes = [16, 32], strides = [1, 1]} : vector<16x128xf32> to vector<16x32xf32>
    %64 = vector.extract_strided_slice %62 {offsets = [0, 32], sizes = [16, 32], strides = [1, 1]} : vector<16x128xf32> to vector<16x32xf32>
    %65 = vector.extract_strided_slice %62 {offsets = [0, 64], sizes = [16, 32], strides = [1, 1]} : vector<16x128xf32> to vector<16x32xf32>
    %cst_37 = arith.constant dense<0.000000e+00> : vector<16x16xf32>
    %66 = tpu.matmul %63, %64, %cst_37 {dimension_numbers = #tpu.dot_dimension_numbers<[1], [1], [0], [0], [0, 0, 1, 0], [], []>} : vector<16x32xf32>, vector<16x32xf32>, vector<16x16xf32> -> vector<16x16xf32>
    %cst_38 = arith.constant 0.0618718415 : f32
    %67 = vector.broadcast %cst_38 : f32 to vector<16x16xf32>
    %68 = arith.mulf %66, %67 : vector<16x16xf32>
    %69 = vector.extract_strided_slice %8 {offsets = [0, 0], sizes = [16, 8], strides = [1, 1]} : vector<16x32xf32> to vector<16x8xf32>
    %70 = math.tanh %69 : vector<16x8xf32>
    %71 = math.exp %70 : vector<16x8xf32>
    %72 = arith.mulf %71, %70 : vector<16x8xf32>
    %cst_39 = arith.constant dense<0.000000e+00> : vector<16xf32>
    %73 = vector.multi_reduction <add>, %71, %cst_39 [1] : vector<16x8xf32> to vector<16xf32>
    %74 = vector.shape_cast %73 : vector<16xf32> to vector<16x1xf32>
    %cst_40 = arith.constant dense<0.000000e+00> : vector<16xf32>
    %75 = vector.multi_reduction <add>, %72, %cst_40 [1] : vector<16x8xf32> to vector<16xf32>
    %76 = vector.shape_cast %75 : vector<16xf32> to vector<16x1xf32>
    %cst_41 = arith.constant 3.000000e-01 : f32
    %77 = vector.broadcast %cst_41 : f32 to vector<16x1xf32>
    %78 = arith.mulf %76, %77 : vector<16x1xf32>
    %cst_42 = arith.constant dense<0.000000e+00> : vector<1x16xf32>
    %79 = tpu.matmul %41, %71, %cst_42 {dimension_numbers = #tpu.dot_dimension_numbers<[1], [1], [0], [0], [0, 0, 1, 0], [], []>} : vector<1x8xf32>, vector<16x8xf32>, vector<1x16xf32> -> vector<1x16xf32>
    %cst_43 = arith.constant dense<0.000000e+00> : vector<1x16xf32>
    %80 = tpu.matmul %42, %72, %cst_43 {dimension_numbers = #tpu.dot_dimension_numbers<[1], [1], [0], [0], [0, 0, 1, 0], [], []>} : vector<1x8xf32>, vector<16x8xf32>, vector<1x16xf32> -> vector<1x16xf32>
    %81 = vector.broadcast %74 : vector<16x1xf32> to vector<16x16xf32>
    %82 = vector.broadcast %79 : vector<1x16xf32> to vector<16x16xf32>
    %83 = arith.addf %81, %82 : vector<16x16xf32>
    %84 = math.log %83 : vector<16x16xf32>
    %cst_44 = arith.constant 3.000000e-01 : f32
    %85 = vector.broadcast %cst_44 : f32 to vector<16x16xf32>
    %86 = arith.mulf %85, %84 : vector<16x16xf32>
    %87 = arith.addf %68, %86 : vector<16x16xf32>
    %88 = vector.broadcast %78 : vector<16x1xf32> to vector<16x16xf32>
    %89 = vector.broadcast %80 : vector<1x16xf32> to vector<16x16xf32>
    %90 = arith.addf %88, %89 : vector<16x16xf32>
    %91 = arith.divf %90, %83 : vector<16x16xf32>
    %92 = arith.subf %87, %91 : vector<16x16xf32>
    %93 = arith.addf %92, %40 : vector<16x16xf32>
    %cst_45 = arith.constant dense<0xFF800000> : vector<16xf32>
    %94 = vector.multi_reduction <maximumf>, %93, %cst_45 [1] : vector<16x16xf32> to vector<16xf32>
    %95 = vector.shape_cast %94 : vector<16xf32> to vector<16x1xf32>
    %96 = vector.broadcast %95 : vector<16x1xf32> to vector<16x16xf32>
    %97 = arith.subf %93, %96 : vector<16x16xf32>
    %98 = math.exp %97 : vector<16x16xf32>
    %cst_46 = arith.constant dense<0.000000e+00> : vector<16xf32>
    %99 = vector.multi_reduction <add>, %98, %cst_46 [1] : vector<16x16xf32> to vector<16xf32>
    %100 = vector.shape_cast %99 : vector<16xf32> to vector<16x1xf32>
    %101 = vector.broadcast %100 : vector<16x1xf32> to vector<16x16xf32>
    %102 = arith.divf %98, %101 : vector<16x16xf32>
    %cst_47 = arith.constant dense<0.000000e+00> : vector<16x32xf32>
    %103 = tpu.matmul %102, %65, %cst_47 {dimension_numbers = #tpu.dot_dimension_numbers<[1], [0], [0], [1], [0, 0, 1, 1], [], []>} : vector<16x16xf32>, vector<16x32xf32>, vector<16x32xf32> -> vector<16x32xf32>
    %cst_48 = arith.constant dense<0.000000e+00> : vector<16x32xf32>
    %104 = tpu.matmul %103, %53, %cst_48 {dimension_numbers = #tpu.dot_dimension_numbers<[1], [0], [0], [1], [0, 0, 1, 1], [], []>} : vector<16x32xf32>, vector<32x32xf32>, vector<16x32xf32> -> vector<16x32xf32>
    %105 = vector.broadcast %54 : vector<1x32xf32> to vector<16x32xf32>
    %106 = arith.addf %104, %105 : vector<16x32xf32>
    %107 = arith.addf %8, %106 : vector<16x32xf32>
    %cst_49 = arith.constant dense<0.000000e+00> : vector<16xf32>
    %108 = vector.multi_reduction <add>, %107, %cst_49 [1] : vector<16x32xf32> to vector<16xf32>
    %109 = vector.shape_cast %108 : vector<16xf32> to vector<16x1xf32>
    %cst_50 = arith.constant 3.200000e+01 : f32
    %110 = vector.broadcast %cst_50 : f32 to vector<16x1xf32>
    %111 = arith.divf %109, %110 : vector<16x1xf32>
    %112 = vector.broadcast %111 : vector<16x1xf32> to vector<16x32xf32>
    %113 = arith.subf %107, %112 : vector<16x32xf32>
    %114 = arith.mulf %113, %113 : vector<16x32xf32>
    %cst_51 = arith.constant dense<0.000000e+00> : vector<16xf32>
    %115 = vector.multi_reduction <add>, %114, %cst_51 [1] : vector<16x32xf32> to vector<16xf32>
    %116 = vector.shape_cast %115 : vector<16xf32> to vector<16x1xf32>
    %cst_52 = arith.constant 3.200000e+01 : f32
    %117 = vector.broadcast %cst_52 : f32 to vector<16x1xf32>
    %118 = arith.divf %116, %117 : vector<16x1xf32>
    %119 = vector.broadcast %111 : vector<16x1xf32> to vector<16x32xf32>
    %120 = arith.subf %107, %119 : vector<16x32xf32>
    %cst_53 = arith.constant 9.99999974E-6 : f32
    %121 = vector.broadcast %cst_53 : f32 to vector<16x1xf32>
    %122 = arith.addf %118, %121 : vector<16x1xf32>
    %123 = math.rsqrt %122 : vector<16x1xf32>
    %124 = vector.broadcast %123 : vector<16x1xf32> to vector<16x32xf32>
    %125 = arith.mulf %120, %124 : vector<16x32xf32>
    %126 = vector.broadcast %56 : vector<1x32xf32> to vector<16x32xf32>
    %127 = arith.mulf %125, %126 : vector<16x32xf32>
    %128 = vector.broadcast %57 : vector<1x32xf32> to vector<16x32xf32>
    %129 = arith.addf %127, %128 : vector<16x32xf32>
    %cst_54 = arith.constant dense<0.000000e+00> : vector<16x128xf32>
    %130 = tpu.matmul %129, %46, %cst_54 {dimension_numbers = #tpu.dot_dimension_numbers<[1], [0], [0], [1], [0, 0, 1, 1], [], []>} : vector<16x32xf32>, vector<32x128xf32>, vector<16x128xf32> -> vector<16x128xf32>
    %131 = vector.broadcast %52 : vector<1x128xf32> to vector<16x128xf32>
    %132 = arith.addf %130, %131 : vector<16x128xf32>
    %cst_55 = arith.constant 0.000000e+00 : f32
    %133 = vector.broadcast %cst_55 : f32 to vector<16x128xf32>
    %134 = arith.maximumf %132, %133 : vector<16x128xf32>
    %cst_56 = arith.constant dense<0.000000e+00> : vector<16x32xf32>
    %135 = tpu.matmul %134, %48, %cst_56 {dimension_numbers = #tpu.dot_dimension_numbers<[1], [1], [0], [0], [0, 0, 1, 0], [], []>} : vector<16x128xf32>, vector<32x128xf32>, vector<16x32xf32> -> vector<16x32xf32>
    %136 = vector.broadcast %55 : vector<1x32xf32> to vector<16x32xf32>
    %137 = arith.addf %135, %136 : vector<16x32xf32>
    %138 = arith.addf %129, %137 : vector<16x32xf32>
    %cst_57 = arith.constant dense<0.000000e+00> : vector<16xf32>
    %139 = vector.multi_reduction <add>, %138, %cst_57 [1] : vector<16x32xf32> to vector<16xf32>
    %140 = vector.shape_cast %139 : vector<16xf32> to vector<16x1xf32>
    %cst_58 = arith.constant 3.200000e+01 : f32
    %141 = vector.broadcast %cst_58 : f32 to vector<16x1xf32>
    %142 = arith.divf %140, %141 : vector<16x1xf32>
    %143 = vector.broadcast %142 : vector<16x1xf32> to vector<16x32xf32>
    %144 = arith.subf %138, %143 : vector<16x32xf32>
    %145 = arith.mulf %144, %144 : vector<16x32xf32>
    %cst_59 = arith.constant dense<0.000000e+00> : vector<16xf32>
    %146 = vector.multi_reduction <add>, %145, %cst_59 [1] : vector<16x32xf32> to vector<16xf32>
    %147 = vector.shape_cast %146 : vector<16xf32> to vector<16x1xf32>
    %cst_60 = arith.constant 3.200000e+01 : f32
    %148 = vector.broadcast %cst_60 : f32 to vector<16x1xf32>
    %149 = arith.divf %147, %148 : vector<16x1xf32>
    %150 = vector.broadcast %142 : vector<16x1xf32> to vector<16x32xf32>
    %151 = arith.subf %138, %150 : vector<16x32xf32>
    %cst_61 = arith.constant 9.99999974E-6 : f32
    %152 = vector.broadcast %cst_61 : f32 to vector<16x1xf32>
    %153 = arith.addf %149, %152 : vector<16x1xf32>
    %154 = math.rsqrt %153 : vector<16x1xf32>
    %155 = vector.broadcast %154 : vector<16x1xf32> to vector<16x32xf32>
    %156 = arith.mulf %151, %155 : vector<16x32xf32>
    %157 = vector.broadcast %58 : vector<1x32xf32> to vector<16x32xf32>
    %158 = arith.mulf %156, %157 : vector<16x32xf32>
    %159 = vector.broadcast %59 : vector<1x32xf32> to vector<16x32xf32>
    %160 = arith.addf %158, %159 : vector<16x32xf32>
    %c1 = arith.constant 1 : index
    %c0_62 = arith.constant 0 : index
    %c0_63 = arith.constant 0 : index
    %161 = vector.load %arg4[%c1, %c0_62, %c0_63] : memref<2x98x128xf32, #tpu.memory_space<vmem>>, vector<1x32x128xf32>
    %162 = vector.shape_cast %161 : vector<1x32x128xf32> to vector<32x128xf32>
    %c1_64 = arith.constant 1 : index
    %c32_65 = arith.constant 32 : index
    %c0_66 = arith.constant 0 : index
    %163 = vector.load %arg4[%c1_64, %c32_65, %c0_66] : memref<2x98x128xf32, #tpu.memory_space<vmem>>, vector<1x32x128xf32>
    %164 = vector.shape_cast %163 : vector<1x32x128xf32> to vector<32x128xf32>
    %c1_67 = arith.constant 1 : index
    %c64_68 = arith.constant 64 : index
    %c0_69 = arith.constant 0 : index
    %165 = vector.load %arg4[%c1_67, %c64_68, %c0_69] : memref<2x98x128xf32, #tpu.memory_space<vmem>>, vector<1x32x128xf32>
    %166 = vector.shape_cast %165 : vector<1x32x128xf32> to vector<32x128xf32>
    %c1_70 = arith.constant 1 : index
    %c96_71 = arith.constant 96 : index
    %c0_72 = arith.constant 0 : index
    %167 = vector.load %arg4[%c1_70, %c96_71, %c0_72] : memref<2x98x128xf32, #tpu.memory_space<vmem>>, vector<1x1x128xf32>
    %168 = vector.shape_cast %167 : vector<1x1x128xf32> to vector<1x128xf32>
    %c1_73 = arith.constant 1 : index
    %c97_74 = arith.constant 97 : index
    %c0_75 = arith.constant 0 : index
    %169 = vector.load %arg4[%c1_73, %c97_74, %c0_75] : memref<2x98x128xf32, #tpu.memory_space<vmem>>, vector<1x1x128xf32>
    %170 = vector.shape_cast %169 : vector<1x1x128xf32> to vector<1x128xf32>
    %c312 = arith.constant 312 : index
    %c0_76 = arith.constant 0 : index
    %171 = vector.load %arg2[%c312, %c0_76] : memref<350x32xf32, #tpu.memory_space<vmem>>, vector<32x32xf32>
    %c344 = arith.constant 344 : index
    %c0_77 = arith.constant 0 : index
    %172 = vector.load %arg2[%c344, %c0_77] : memref<350x32xf32, #tpu.memory_space<vmem>>, vector<1x32xf32>
    %c345 = arith.constant 345 : index
    %c0_78 = arith.constant 0 : index
    %173 = vector.load %arg2[%c345, %c0_78] : memref<350x32xf32, #tpu.memory_space<vmem>>, vector<1x32xf32>
    %c346 = arith.constant 346 : index
    %c0_79 = arith.constant 0 : index
    %174 = vector.load %arg2[%c346, %c0_79] : memref<350x32xf32, #tpu.memory_space<vmem>>, vector<1x32xf32>
    %c347 = arith.constant 347 : index
    %c0_80 = arith.constant 0 : index
    %175 = vector.load %arg2[%c347, %c0_80] : memref<350x32xf32, #tpu.memory_space<vmem>>, vector<1x32xf32>
    %c348 = arith.constant 348 : index
    %c0_81 = arith.constant 0 : index
    %176 = vector.load %arg2[%c348, %c0_81] : memref<350x32xf32, #tpu.memory_space<vmem>>, vector<1x32xf32>
    %c349 = arith.constant 349 : index
    %c0_82 = arith.constant 0 : index
    %177 = vector.load %arg2[%c349, %c0_82] : memref<350x32xf32, #tpu.memory_space<vmem>>, vector<1x32xf32>
    %cst_83 = arith.constant dense<0.000000e+00> : vector<16x128xf32>
    %178 = tpu.matmul %160, %162, %cst_83 {dimension_numbers = #tpu.dot_dimension_numbers<[1], [0], [0], [1], [0, 0, 1, 1], [], []>} : vector<16x32xf32>, vector<32x128xf32>, vector<16x128xf32> -> vector<16x128xf32>
    %179 = vector.broadcast %168 : vector<1x128xf32> to vector<16x128xf32>
    %180 = arith.addf %178, %179 : vector<16x128xf32>
    %181 = vector.extract_strided_slice %180 {offsets = [0, 0], sizes = [16, 32], strides = [1, 1]} : vector<16x128xf32> to vector<16x32xf32>
    %182 = vector.extract_strided_slice %180 {offsets = [0, 32], sizes = [16, 32], strides = [1, 1]} : vector<16x128xf32> to vector<16x32xf32>
    %183 = vector.extract_strided_slice %180 {offsets = [0, 64], sizes = [16, 32], strides = [1, 1]} : vector<16x128xf32> to vector<16x32xf32>
    %cst_84 = arith.constant dense<0.000000e+00> : vector<16x16xf32>
    %184 = tpu.matmul %181, %182, %cst_84 {dimension_numbers = #tpu.dot_dimension_numbers<[1], [1], [0], [0], [0, 0, 1, 0], [], []>} : vector<16x32xf32>, vector<16x32xf32>, vector<16x16xf32> -> vector<16x16xf32>
    %cst_85 = arith.constant 0.0618718415 : f32
    %185 = vector.broadcast %cst_85 : f32 to vector<16x16xf32>
    %186 = arith.mulf %184, %185 : vector<16x16xf32>
    %187 = vector.extract_strided_slice %160 {offsets = [0, 0], sizes = [16, 8], strides = [1, 1]} : vector<16x32xf32> to vector<16x8xf32>
    %188 = math.tanh %187 : vector<16x8xf32>
    %189 = math.exp %188 : vector<16x8xf32>
    %190 = arith.mulf %189, %188 : vector<16x8xf32>
    %cst_86 = arith.constant dense<0.000000e+00> : vector<16xf32>
    %191 = vector.multi_reduction <add>, %189, %cst_86 [1] : vector<16x8xf32> to vector<16xf32>
    %192 = vector.shape_cast %191 : vector<16xf32> to vector<16x1xf32>
    %cst_87 = arith.constant dense<0.000000e+00> : vector<16xf32>
    %193 = vector.multi_reduction <add>, %190, %cst_87 [1] : vector<16x8xf32> to vector<16xf32>
    %194 = vector.shape_cast %193 : vector<16xf32> to vector<16x1xf32>
    %cst_88 = arith.constant 3.000000e-01 : f32
    %195 = vector.broadcast %cst_88 : f32 to vector<16x1xf32>
    %196 = arith.mulf %194, %195 : vector<16x1xf32>
    %cst_89 = arith.constant dense<0.000000e+00> : vector<1x16xf32>
    %197 = tpu.matmul %41, %189, %cst_89 {dimension_numbers = #tpu.dot_dimension_numbers<[1], [1], [0], [0], [0, 0, 1, 0], [], []>} : vector<1x8xf32>, vector<16x8xf32>, vector<1x16xf32> -> vector<1x16xf32>
    %cst_90 = arith.constant dense<0.000000e+00> : vector<1x16xf32>
    %198 = tpu.matmul %42, %190, %cst_90 {dimension_numbers = #tpu.dot_dimension_numbers<[1], [1], [0], [0], [0, 0, 1, 0], [], []>} : vector<1x8xf32>, vector<16x8xf32>, vector<1x16xf32> -> vector<1x16xf32>
    %199 = vector.broadcast %192 : vector<16x1xf32> to vector<16x16xf32>
    %200 = vector.broadcast %197 : vector<1x16xf32> to vector<16x16xf32>
    %201 = arith.addf %199, %200 : vector<16x16xf32>
    %202 = math.log %201 : vector<16x16xf32>
    %cst_91 = arith.constant 3.000000e-01 : f32
    %203 = vector.broadcast %cst_91 : f32 to vector<16x16xf32>
    %204 = arith.mulf %203, %202 : vector<16x16xf32>
    %205 = arith.addf %186, %204 : vector<16x16xf32>
    %206 = vector.broadcast %196 : vector<16x1xf32> to vector<16x16xf32>
    %207 = vector.broadcast %198 : vector<1x16xf32> to vector<16x16xf32>
    %208 = arith.addf %206, %207 : vector<16x16xf32>
    %209 = arith.divf %208, %201 : vector<16x16xf32>
    %210 = arith.subf %205, %209 : vector<16x16xf32>
    %211 = arith.addf %210, %40 : vector<16x16xf32>
    %cst_92 = arith.constant dense<0xFF800000> : vector<16xf32>
    %212 = vector.multi_reduction <maximumf>, %211, %cst_92 [1] : vector<16x16xf32> to vector<16xf32>
    %213 = vector.shape_cast %212 : vector<16xf32> to vector<16x1xf32>
    %214 = vector.broadcast %213 : vector<16x1xf32> to vector<16x16xf32>
    %215 = arith.subf %211, %214 : vector<16x16xf32>
    %216 = math.exp %215 : vector<16x16xf32>
    %cst_93 = arith.constant dense<0.000000e+00> : vector<16xf32>
    %217 = vector.multi_reduction <add>, %216, %cst_93 [1] : vector<16x16xf32> to vector<16xf32>
    %218 = vector.shape_cast %217 : vector<16xf32> to vector<16x1xf32>
    %219 = vector.broadcast %218 : vector<16x1xf32> to vector<16x16xf32>
    %220 = arith.divf %216, %219 : vector<16x16xf32>
    %cst_94 = arith.constant dense<0.000000e+00> : vector<16x32xf32>
    %221 = tpu.matmul %220, %183, %cst_94 {dimension_numbers = #tpu.dot_dimension_numbers<[1], [0], [0], [1], [0, 0, 1, 1], [], []>} : vector<16x16xf32>, vector<16x32xf32>, vector<16x32xf32> -> vector<16x32xf32>
    %cst_95 = arith.constant dense<0.000000e+00> : vector<16x32xf32>
    %222 = tpu.matmul %221, %171, %cst_95 {dimension_numbers = #tpu.dot_dimension_numbers<[1], [0], [0], [1], [0, 0, 1, 1], [], []>} : vector<16x32xf32>, vector<32x32xf32>, vector<16x32xf32> -> vector<16x32xf32>
    %223 = vector.broadcast %172 : vector<1x32xf32> to vector<16x32xf32>
    %224 = arith.addf %222, %223 : vector<16x32xf32>
    %225 = arith.addf %160, %224 : vector<16x32xf32>
    %cst_96 = arith.constant dense<0.000000e+00> : vector<16xf32>
    %226 = vector.multi_reduction <add>, %225, %cst_96 [1] : vector<16x32xf32> to vector<16xf32>
    %227 = vector.shape_cast %226 : vector<16xf32> to vector<16x1xf32>
    %cst_97 = arith.constant 3.200000e+01 : f32
    %228 = vector.broadcast %cst_97 : f32 to vector<16x1xf32>
    %229 = arith.divf %227, %228 : vector<16x1xf32>
    %230 = vector.broadcast %229 : vector<16x1xf32> to vector<16x32xf32>
    %231 = arith.subf %225, %230 : vector<16x32xf32>
    %232 = arith.mulf %231, %231 : vector<16x32xf32>
    %cst_98 = arith.constant dense<0.000000e+00> : vector<16xf32>
    %233 = vector.multi_reduction <add>, %232, %cst_98 [1] : vector<16x32xf32> to vector<16xf32>
    %234 = vector.shape_cast %233 : vector<16xf32> to vector<16x1xf32>
    %cst_99 = arith.constant 3.200000e+01 : f32
    %235 = vector.broadcast %cst_99 : f32 to vector<16x1xf32>
    %236 = arith.divf %234, %235 : vector<16x1xf32>
    %237 = vector.broadcast %229 : vector<16x1xf32> to vector<16x32xf32>
    %238 = arith.subf %225, %237 : vector<16x32xf32>
    %cst_100 = arith.constant 9.99999974E-6 : f32
    %239 = vector.broadcast %cst_100 : f32 to vector<16x1xf32>
    %240 = arith.addf %236, %239 : vector<16x1xf32>
    %241 = math.rsqrt %240 : vector<16x1xf32>
    %242 = vector.broadcast %241 : vector<16x1xf32> to vector<16x32xf32>
    %243 = arith.mulf %238, %242 : vector<16x32xf32>
    %244 = vector.broadcast %174 : vector<1x32xf32> to vector<16x32xf32>
    %245 = arith.mulf %243, %244 : vector<16x32xf32>
    %246 = vector.broadcast %175 : vector<1x32xf32> to vector<16x32xf32>
    %247 = arith.addf %245, %246 : vector<16x32xf32>
    %cst_101 = arith.constant dense<0.000000e+00> : vector<16x128xf32>
    %248 = tpu.matmul %247, %164, %cst_101 {dimension_numbers = #tpu.dot_dimension_numbers<[1], [0], [0], [1], [0, 0, 1, 1], [], []>} : vector<16x32xf32>, vector<32x128xf32>, vector<16x128xf32> -> vector<16x128xf32>
    %249 = vector.broadcast %170 : vector<1x128xf32> to vector<16x128xf32>
    %250 = arith.addf %248, %249 : vector<16x128xf32>
    %cst_102 = arith.constant 0.000000e+00 : f32
    %251 = vector.broadcast %cst_102 : f32 to vector<16x128xf32>
    %252 = arith.maximumf %250, %251 : vector<16x128xf32>
    %cst_103 = arith.constant dense<0.000000e+00> : vector<16x32xf32>
    %253 = tpu.matmul %252, %166, %cst_103 {dimension_numbers = #tpu.dot_dimension_numbers<[1], [1], [0], [0], [0, 0, 1, 0], [], []>} : vector<16x128xf32>, vector<32x128xf32>, vector<16x32xf32> -> vector<16x32xf32>
    %254 = vector.broadcast %173 : vector<1x32xf32> to vector<16x32xf32>
    %255 = arith.addf %253, %254 : vector<16x32xf32>
    %256 = arith.addf %247, %255 : vector<16x32xf32>
    %cst_104 = arith.constant dense<0.000000e+00> : vector<16xf32>
    %257 = vector.multi_reduction <add>, %256, %cst_104 [1] : vector<16x32xf32> to vector<16xf32>
    %258 = vector.shape_cast %257 : vector<16xf32> to vector<16x1xf32>
    %cst_105 = arith.constant 3.200000e+01 : f32
    %259 = vector.broadcast %cst_105 : f32 to vector<16x1xf32>
    %260 = arith.divf %258, %259 : vector<16x1xf32>
    %261 = vector.broadcast %260 : vector<16x1xf32> to vector<16x32xf32>
    %262 = arith.subf %256, %261 : vector<16x32xf32>
    %263 = arith.mulf %262, %262 : vector<16x32xf32>
    %cst_106 = arith.constant dense<0.000000e+00> : vector<16xf32>
    %264 = vector.multi_reduction <add>, %263, %cst_106 [1] : vector<16x32xf32> to vector<16xf32>
    %265 = vector.shape_cast %264 : vector<16xf32> to vector<16x1xf32>
    %cst_107 = arith.constant 3.200000e+01 : f32
    %266 = vector.broadcast %cst_107 : f32 to vector<16x1xf32>
    %267 = arith.divf %265, %266 : vector<16x1xf32>
    %268 = vector.broadcast %260 : vector<16x1xf32> to vector<16x32xf32>
    %269 = arith.subf %256, %268 : vector<16x32xf32>
    %cst_108 = arith.constant 9.99999974E-6 : f32
    %270 = vector.broadcast %cst_108 : f32 to vector<16x1xf32>
    %271 = arith.addf %267, %270 : vector<16x1xf32>
    %272 = math.rsqrt %271 : vector<16x1xf32>
    %273 = vector.broadcast %272 : vector<16x1xf32> to vector<16x32xf32>
    %274 = arith.mulf %269, %273 : vector<16x32xf32>
    %275 = vector.broadcast %176 : vector<1x32xf32> to vector<16x32xf32>
    %276 = arith.mulf %274, %275 : vector<16x32xf32>
    %277 = vector.broadcast %177 : vector<1x32xf32> to vector<16x32xf32>
    %278 = arith.addf %276, %277 : vector<16x32xf32>
    %cst_109 = arith.constant dense<0.000000e+00> : vector<16xf32>
    %279 = vector.multi_reduction <add>, %278, %cst_109 [1] : vector<16x32xf32> to vector<16xf32>
    %280 = vector.shape_cast %279 : vector<16xf32> to vector<16x1xf32>
    %cst_110 = arith.constant 3.200000e+01 : f32
    %281 = vector.broadcast %cst_110 : f32 to vector<16x1xf32>
    %282 = arith.divf %280, %281 : vector<16x1xf32>
    %283 = vector.broadcast %282 : vector<16x1xf32> to vector<16x32xf32>
    %284 = arith.subf %278, %283 : vector<16x32xf32>
    %285 = arith.mulf %284, %284 : vector<16x32xf32>
    %cst_111 = arith.constant dense<0.000000e+00> : vector<16xf32>
    %286 = vector.multi_reduction <add>, %285, %cst_111 [1] : vector<16x32xf32> to vector<16xf32>
    %287 = vector.shape_cast %286 : vector<16xf32> to vector<16x1xf32>
    %cst_112 = arith.constant 3.200000e+01 : f32
    %288 = vector.broadcast %cst_112 : f32 to vector<16x1xf32>
    %289 = arith.divf %287, %288 : vector<16x1xf32>
    %290 = vector.broadcast %282 : vector<16x1xf32> to vector<16x32xf32>
    %291 = arith.subf %278, %290 : vector<16x32xf32>
    %cst_113 = arith.constant 9.99999974E-6 : f32
    %292 = vector.broadcast %cst_113 : f32 to vector<16x1xf32>
    %293 = arith.addf %289, %292 : vector<16x1xf32>
    %294 = math.rsqrt %293 : vector<16x1xf32>
    %295 = vector.broadcast %294 : vector<16x1xf32> to vector<16x32xf32>
    %296 = arith.mulf %291, %295 : vector<16x32xf32>
    %297 = vector.broadcast %2 : vector<1x32xf32> to vector<16x32xf32>
    %298 = arith.mulf %296, %297 : vector<16x32xf32>
    %299 = vector.broadcast %3 : vector<1x32xf32> to vector<16x32xf32>
    %300 = arith.addf %298, %299 : vector<16x32xf32>
    %cst_114 = arith.constant dense<0.000000e+00> : vector<16x128xf32>
    %301 = tpu.matmul %300, %4, %cst_114 {dimension_numbers = #tpu.dot_dimension_numbers<[1], [0], [0], [1], [0, 0, 1, 1], [], []>} : vector<16x32xf32>, vector<32x128xf32>, vector<16x128xf32> -> vector<16x128xf32>
    %302 = vector.broadcast %5 : vector<1x128xf32> to vector<16x128xf32>
    %303 = arith.addf %301, %302 : vector<16x128xf32>
    %c0_115 = arith.constant 0 : index
    %c0_116 = arith.constant 0 : index
    %304 = vector.load %arg5[%c0_115, %c0_116] : memref<16x128xf32, #tpu.memory_space<vmem>>, vector<16x128xf32>
    tpu.vector_store %arg5[%c0_115, %c0_116], %303 {strides = array<i32>} : memref<16x128xf32, #tpu.memory_space<vmem>>, vector<16x128xf32>,
    return
  }
  func.func @transform_0(%arg0: i32) -> (i32, i32) {
    %c0_i32 = arith.constant 0 : i32
    %c0_i32_0 = arith.constant 0 : i32
    %c0_i32_1 = arith.constant 0 : i32
    return %c0_i32, %c0_i32_0 : i32, i32
  }
  func.func @transform_1(%arg0: i32) -> (i32, i32) {
    %c0_i32 = arith.constant 0 : i32
    %c0_i32_0 = arith.constant 0 : i32
    %c0_i32_1 = arith.constant 0 : i32
    return %c0_i32, %c0_i32_0 : i32, i32
  }
  func.func @transform_2(%arg0: i32) -> (i32, i32) {
    %c0_i32 = arith.constant 0 : i32
    %c0_i32_0 = arith.constant 0 : i32
    %c0_i32_1 = arith.constant 0 : i32
    return %c0_i32, %c0_i32_0 : i32, i32
  }
  func.func @transform_3(%arg0: i32) -> (i32, i32, i32) {
    %c0_i32 = arith.constant 0 : i32
    %c0_i32_0 = arith.constant 0 : i32
    %c0_i32_1 = arith.constant 0 : i32
    %c0_i32_2 = arith.constant 0 : i32
    return %c0_i32, %c0_i32_0, %c0_i32_1 : i32, i32, i32
  }
  func.func @transform_4(%arg0: i32) -> (i32, i32) {
    %c0_i32 = arith.constant 0 : i32
    %c0_i32_0 = arith.constant 0 : i32
    %c0_i32_1 = arith.constant 0 : i32
    return %c0_i32, %c0_i32_0 : i32, i32
  }
}

</mosaic_0001>

<llo_original>
// kernel: qvit_forward.1
$region0: #{qvit_forward.1}
  #allocation0 [shape = 'u32[]', space=smem, size = 0x4, offset = 0x4, fixed_abs, tag = 'smem constant byte address 0x4 - core index']
  #allocation1 [shape = 'u32[144,128]{1,0:T(1,128)}', space=vmem, size = 0x12000, scoped, tag = 'internal scratch']
  %s0 = inlined_call_operand.vmem [shape: f32[16,256], index: 0, kind: input, shape index: {}]
  %s1 = inlined_call_operand.vmem [shape: f32[350,32], index: 1, kind: input, shape index: {}]
  %s2 = inlined_call_operand.vmem [shape: f32[33,128], index: 2, kind: input, shape index: {}]
  %s3 = inlined_call_operand.vmem [shape: f32[2,98,128], index: 3, kind: input, shape index: {}]
  %s4 = inlined_call_operand.vmem [shape: f32[16,128], index: 4, kind: output, shape index: {}]
  %s5 = sld [smem:[#allocation0]]
  $region26: #{qvit_forward.1} parent=0
    _
  %s7 = ssub.s32 1, %s5
  %s8 = scalar_select 0, %s7, %s5
  // Predicated region
  $region2: #{qvit_forward.1} parent=0 // pred_check
    _
  $region3: #{qvit_forward.1} parent=0 // pred_check_branch
    %10 = sbr.rel (0) target = $region5
  $region4: #{qvit_forward.1} parent=0 // pred_region
    _
  $region5: #{qvit_forward.1} parent=0 // pred_fallthru
    _
  // Predicated region
  $region6: #{qvit_forward.1} parent=0 // pred_check
    _
  $region7: #{qvit_forward.1} parent=0 // pred_check_branch
    %12 = sbr.rel (0) target = $region9
  $region8: #{qvit_forward.1} parent=0 // pred_region
    _
  $region9: #{qvit_forward.1} parent=0 // pred_fallthru
    _
  // Predicated region
  $region10: #{qvit_forward.1} parent=0 // pred_check
    _
  $region11: #{qvit_forward.1} parent=0 // pred_check_branch
    %14 = sbr.rel (0) target = $region13
  $region12: #{qvit_forward.1} parent=0 // pred_region
    _
  $region13: #{qvit_forward.1} parent=0 // pred_fallthru
    _
  // Predicated region
  $region14: #{qvit_forward.1} parent=0 // pred_check
    _
  $region15: #{qvit_forward.1} parent=0 // pred_check_branch
    %16 = sbr.rel (0) target = $region17
  $region16: #{qvit_forward.1} parent=0 // pred_region
    _
  $region17: #{qvit_forward.1} parent=0 // pred_fallthru
    _
  %v17 = vld [vmem:[%s1] sm:$0xff]
  %v18 = vld [vmem:[%s1 + $0x8] sm:$0xff]
  %v19 = vld [vmem:[%s1 + $0x10] sm:$0xff]
  %v20 = vld [vmem:[%s1 + $0x18] sm:$0xff]
  %v21 = vld [vmem:[%s1 + $0x20] sm:$0xff]
  %v22 = vld [vmem:[%s1 + $0x28] sm:$0xff]
  %v23 = vld [vmem:[%s1 + $0x30] sm:$0xff]
  %v24 = vld [vmem:[%s1 + $0x38] sm:$0xff]
  %v25 = vld [vmem:[%s1 + $0x40] sm:$0xff]
  %v26 = vld [vmem:[%s1 + $0x48] sm:$0xff]
  %v27 = vld [vmem:[%s1 + $0x50] sm:$0xff]
  %v28 = vld [vmem:[%s1 + $0x58] sm:$0xff]
  %v29 = vld [vmem:[%s1 + $0x60] sm:$0xff]
  %v30 = vld [vmem:[%s1 + $0x68] sm:$0xff]
  %v31 = vld [vmem:[%s1 + $0x70] sm:$0xff]
  %v32 = vld [vmem:[%s1 + $0x78] sm:$0xff]
  %v33 = vld [vmem:[%s1 + $0x80] sm:$0xff]
  %v34 = vld [vmem:[%s1 + $0x88] sm:$0xff]
  %v35 = vld [vmem:[%s1 + $0x90] sm:$0xff]
  %v36 = vld [vmem:[%s1 + $0x98] sm:$0xff]
  %v37 = vld [vmem:[%s1 + $0xa0] sm:$0xff]
  %v38 = vld [vmem:[%s1 + $0xa8] sm:$0xff]
  %v39 = vld [vmem:[%s1 + $0xb0] sm:$0xff]
  %v40 = vld [vmem:[%s1 + $0xb8] sm:$0xff]
  %v41 = vld [vmem:[%s1 + $0xc0] sm:$0xff]
  %v42 = vld [vmem:[%s1 + $0xc8] sm:$0xff]
  %v43 = vld [vmem:[%s1 + $0xd0] sm:$0xff]
  %v44 = vld [vmem:[%s1 + $0xd8] sm:$0xff]
  %v45 = vld [vmem:[%s1 + $0xe0] sm:$0xff]
  %v46 = vld [vmem:[%s1 + $0xe8] sm:$0xff]
  %v47 = vld [vmem:[%s1 + $0xf0] sm:$0xff]
  %v48 = vld [vmem:[%s1 + $0xf8] sm:$0xff]
  %v49 = vld [vmem:[%s1 + $0x100] sm:$0xff]
  %v50 = vld [vmem:[%s1 + $0x108] sm:$0xff]
  %v51 = vld [vmem:[%s1 + $0x110] sm:$0x1]
  %v52 = vld [vmem:[%s1 + $0x111] sm:$0x1]
  %v53 = vld [vmem:[%s2] sm:$0xff]
  %v54 = vld [vmem:[%s2 + $0x8] sm:$0xff]
  %v55 = vld [vmem:[%s2 + $0x10] sm:$0xff]
  %v56 = vld [vmem:[%s2 + $0x18] sm:$0xff]
  %v57 = vld [vmem:[%s2 + $0x20] sm:$0x1]
  %v58 = vld [vmem:[%s0] sm:$0xff]
  %v59 = vld [vmem:[%s0 + $0x8] sm:$0xff]
  %v60 = vld [vmem:[%s0 + $0x10] sm:$0xff]
  %v61 = vld [vmem:[%s0 + $0x18] sm:$0xff]
  %62 = vmatprep.subr.mxu0 0.0
  %63 = vmatpush1.msra.mxu0 %v17
  %64 = vmatprep.subr.mxu0 0.0
  %65 = vmatpush1.msra.mxu0 %v18
  %66 = vmatprep.subr.mxu0 0.0
  %67 = vmatpush1.msra.mxu0 %v19
  %68 = vmatprep.subr.mxu0 0.0
  %69 = vmatpush1.msra.mxu0 %v20
  %70 = vmatprep.subr.mxu0 0.0
  %71 = vmatpush1.msra.mxu0 %v21
  %72 = vmatprep.subr.mxu0 0.0
  %73 = vmatpush1.msra.mxu0 %v22
  %74 = vmatprep.subr.mxu0 0.0
  %75 = vmatpush1.msra.mxu0 %v23
  %76 = vmatprep.subr.mxu0 0.0
  %77 = vmatpush1.msra.mxu0 %v24
  %78 = vmatprep.subr.mxu0 0.0
  %79 = vmatpush1.msra.mxu0 %v25
  %80 = vmatprep.subr.mxu0 0.0
  %81 = vmatpush1.msra.mxu0 %v26
  %82 = vmatprep.subr.mxu0 0.0
  %83 = vmatpush1.msra.mxu0 %v27
  %84 = vmatprep.subr.mxu0 0.0
  %85 = vmatpush1.msra.mxu0 %v28
  %86 = vmatprep.subr.mxu0 0.0
  %87 = vmatpush1.msra.mxu0 %v29
  %88 = vmatprep.subr.mxu0 0.0
  %89 = vmatpush1.msra.mxu0 %v30
  %90 = vmatprep.subr.mxu0 0.0
  %91 = vmatpush1.msra.mxu0 %v31
  %92 = vmatprep.subr.mxu0 0.0
  %93 = vmatpush1.msra.mxu0 %v32
  %94 = vmatprep.subr.mxu0 0.0
  %95 = vmatpush1.msra.mxu0 %v33
  %96 = vmatprep.subr.mxu0 0.0
  %97 = vmatpush1.msra.mxu0 %v34
  %98 = vmatprep.subr.mxu0 0.0
  %99 = vmatpush1.msra.mxu0 %v35
  %100 = vmatprep.subr.mxu0 0.0
  %101 = vmatpush1.msra.mxu0 %v36
  %102 = vmatprep.subr.mxu0 0.0
  %103 = vmatpush1.msra.mxu0 %v37
  %104 = vmatprep.subr.mxu0 0.0
  %105 = vmatpush1.msra.mxu0 %v38
  %106 = vmatprep.subr.mxu0 0.0
  %107 = vmatpush1.msra.mxu0 %v39
  %108 = vmatprep.subr.mxu0 0.0
  %109 = vmatpush1.msra.mxu0 %v40
  %110 = vmatprep.subr.mxu0 0.0
  %111 = vmatpush1.msra.mxu0 %v41
  %112 = vmatprep.subr.mxu0 0.0
  %113 = vmatpush1.msra.mxu0 %v42
  %114 = vmatprep.subr.mxu0 0.0
  %115 = vmatpush1.msra.mxu0 %v43
  %116 = vmatprep.subr.mxu0 0.0
  %117 = vmatpush1.msra.mxu0 %v44
  %118 = vmatprep.subr.mxu0 0.0
  %119 = vmatpush1.msra.mxu0 %v45
  %120 = vmatprep.subr.mxu0 0.0
  %121 = vmatpush1.msra.mxu0 %v46
  %122 = vmatprep.subr.mxu0 0.0
  %123 = vmatpush1.msra.mxu0 %v47
  %124 = vmatprep.subr.mxu0 0.0
  %125 = vmatpush1.msra.mxu0 %v48
  %126 = vmatprep.mubr.f32.mxu0 %v59
  %127 = vmatmul.mubr.f32.gmra.mrb[0].mxu0 %v58
  %v128 = vpop.f32.mrb[0].mxu0
  %v129 = vadd.f32 %v49, %v128
  %v130 = vpop.f32.mrb[0].mxu0
  %131 = vmatprep.mubr.f32.mxu0 %v61
  %132 = vmatmul.mubr.f32.gmra.mrb[0].mxu0 %v60
  %v133 = vpop.f32.mrb[0].mxu0
  %v134 = vadd.f32 %v50, %v133
  %v135 = vpop.f32.mrb[0].mxu0
  %136 = vdwg.mxu0
  %v137 = vlaneseq
  %v138 = vshrl.u32 %v137, 7
  %v139 = vadd.s32 %v138, 8
  %v140 = vlaneseq
  %v141 = vand.u32 %v140, 127
  %vm142 = vcmp.ge.s32.totalorder %v138, 5
  %vm143 = vcmp.ge.s32.totalorder %v139, 5
  %v144 = vsel %vm142, 1, 0
  %v145 = vsel %vm143, 1, 0
  %vm146 = vcmp.ge.s32.totalorder %v141, 5
  %v147 = vsel %vm146, 1, 0
  %vm148 = vcmp.ge.s32.totalorder %v138, 10
  %vm149 = vcmp.ge.s32.totalorder %v139, 10
  %v150 = vsel %vm148, 1, 0
  %v151 = vsel %vm149, 1, 0
  %v152 = vadd.s32 %v144, %v150
  %v153 = vadd.s32 %v145, %v151
  %vm154 = vcmp.ge.s32.totalorder %v141, 10
  %v155 = vsel %vm154, 1, 0
  %v156 = vadd.s32 %v147, %v155
  %vm157 = vcmp.ge.s32.totalorder %v138, 15
  %vm158 = vcmp.ge.s32.totalorder %v139, 15
  %v159 = vsel %vm157, 1, 0
  %v160 = vsel %vm158, 1, 0
  %v161 = vadd.s32 %v152, %v159
  %v162 = vadd.s32 %v153, %v160
  %vm163 = vcmp.ge.s32.totalorder %v141, 15
  %v164 = vsel %vm163, 1, 0
  %v165 = vadd.s32 %v156, %v164
  %vm166 = vcmp.eq.s32.totalorder %v161, %v165
  %vm167 = vcmp.eq.s32.totalorder %v162, %v165
  %v168 = vsel %vm166, 0.0, -1e+09
  %v169 = vsel %vm167, 0.0, -1e+09
  %v170 = vld [vmem:[%s3] sm:$0xff]
  %v171 = vld [vmem:[%s3 + $0x8] sm:$0xff]
  %v172 = vld [vmem:[%s3 + $0x10] sm:$0xff]
  %v173 = vld [vmem:[%s3 + $0x18] sm:$0xff]
  %v174 = vld [vmem:[%s3 + $0x20] sm:$0xff]
  %v175 = vld [vmem:[%s3 + $0x28] sm:$0xff]
  %v176 = vld [vmem:[%s3 + $0x30] sm:$0xff]
  %v177 = vld [vmem:[%s3 + $0x38] sm:$0xff]
  %v178 = vld [vmem:[%s3 + $0x40] sm:$0xff]
  %v179 = vld [vmem:[%s3 + $0x48] sm:$0xff]
  %v180 = vld [vmem:[%s3 + $0x50] sm:$0xff]
  %v181 = vld [vmem:[%s3 + $0x58] sm:$0xff]
  %v182 = vld [vmem:[%s3 + $0x60] sm:$0x1]
  %v183 = vld [vmem:[%s3 + $0x61] sm:$0x1]
  %v184 = vld [vmem:[%s1 + $0x112] sm:$0xff]
  %v185 = vld [vmem:[%s1 + $0x11a] sm:$0xff]
  %v186 = vld [vmem:[%s1 + $0x122] sm:$0xff]
  %v187 = vld [vmem:[%s1 + $0x12a] sm:$0xff]
  %v188 = vld [vmem:[%s1 + $0x132] sm:$0x1]
  %v189 = vld [vmem:[%s1 + $0x133] sm:$0x1]
  %v190 = vld [vmem:[%s1 + $0x134] sm:$0x1]
  %v191 = vld [vmem:[%s1 + $0x135] sm:$0x1]
  %v192 = vld [vmem:[%s1 + $0x136] sm:$0x1]
  %v193 = vld [vmem:[%s1 + $0x137] sm:$0x1]
  %v194 = vlaneseq
  %v195 = vshrl.u32 %v194, 7
  %v196 = vsub.s32 0, %v195
  %v197 = vrot.slane %v182, %v196
  %vm198 = vcmask 261120
  %v200 = vsel %vm198, %v129, 0
  %v203 = vsel %vm198, %v134, 0
  %205 = vmatprep.subr.mxu0 0.0
  %206 = vmatpush1.msra.mxu0 %v170
  %207 = vmatprep.subr.mxu0 0.0
  %208 = vmatpush1.msra.mxu0 %v171
  %209 = vmatprep.subr.mxu0 0.0
  %210 = vmatpush1.msra.mxu0 %v172
  %211 = vmatprep.subr.mxu0 0.0
  %212 = vmatpush1.msra.mxu0 %v173
  %213 = vmatprep.subr.mxu0 0.0
  %214 = vmatpush1.msra.mxu0 0.0
  %215 = vmatprep.subr.mxu0 0.0
  %216 = vmatpush1.msra.mxu0 0.0
  %217 = vmatprep.subr.mxu0 0.0
  %218 = vmatpush1.msra.mxu0 0.0
  %219 = vmatprep.subr.mxu0 0.0
  %220 = vmatpush1.msra.mxu0 0.0
  %221 = vmatprep.subr.mxu0 0.0
  %222 = vmatpush1.msra.mxu0 0.0
  %223 = vmatprep.subr.mxu0 0.0
  %224 = vmatpush1.msra.mxu0 0.0
  %225 = vmatprep.subr.mxu0 0.0
  %226 = vmatpush1.msra.mxu0 0.0
  %227 = vmatprep.subr.mxu0 0.0
  %228 = vmatpush1.msra.mxu0 0.0
  %229 = vmatprep.subr.mxu0 0.0
  %230 = vmatpush1.msra.mxu0 0.0
  %231 = vmatprep.subr.mxu0 0.0
  %232 = vmatpush1.msra.mxu0 0.0
  %233 = vmatprep.subr.mxu0 0.0
  %234 = vmatpush1.msra.mxu0 0.0
  %235 = vmatprep.subr.mxu0 0.0
  %236 = vmatpush1.msra.mxu0 0.0
  %237 = vmatprep.subr.mxu0 0.0
  %238 = vmatpush1.msra.mxu0 0.0
  %239 = vmatprep.subr.mxu0 0.0
  %240 = vmatpush1.msra.mxu0 0.0
  %241 = vmatprep.subr.mxu0 0.0
  %242 = vmatpush1.msra.mxu0 0.0
  %243 = vmatprep.subr.mxu0 0.0
  %244 = vmatpush1.msra.mxu0 0.0
  %245 = vmatprep.subr.mxu0 0.0
  %246 = vmatpush1.msra.mxu0 0.0
  %247 = vmatprep.subr.mxu0 0.0
  %248 = vmatpush1.msra.mxu0 0.0
  %249 = vmatprep.subr.mxu0 0.0
  %250 = vmatpush1.msra.mxu0 0.0
  %251 = vmatprep.subr.mxu0 0.0
  %252 = vmatpush1.msra.mxu0 0.0
  %253 = vmatprep.subr.mxu0 0.0
  %254 = vmatpush1.msra.mxu0 0.0
  %255 = vmatprep.subr.mxu0 0.0
  %256 = vmatpush1.msra.mxu0 0.0
  %257 = vmatprep.subr.mxu0 0.0
  %258 = vmatpush1.msra.mxu0 0.0
  %259 = vmatprep.subr.mxu0 0.0
  %260 = vmatpush1.msra.mxu0 0.0
  %261 = vmatprep.subr.mxu0 0.0
  %262 = vmatpush1.msra.mxu0 0.0
  %263 = vmatprep.subr.mxu0 0.0
  %264 = vmatpush1.msra.mxu0 0.0
  %265 = vmatprep.subr.mxu0 0.0
  %266 = vmatpush1.msra.mxu0 0.0
  %267 = vmatprep.subr.mxu0 0.0
  %268 = vmatpush1.msra.mxu0 0.0
  %269 = vmatprep.mubr.f32.mxu0 0.0
  %270 = vmatmul.mubr.f32.gmra.mrb[0].mxu0 %v200
  %v271 = vpop.f32.mrb[0].mxu0
  %v272 = vadd.f32 %v197, %v271
  %v273 = vpop.f32.mrb[0].mxu0
  %274 = vmatprep.mubr.f32.mxu0 0.0
  %275 = vmatmul.mubr.f32.gmra.mrb[0].mxu0 %v203
  %v276 = vpop.f32.mrb[0].mxu0
  %v277 = vadd.f32 %v197, %v276
  %v278 = vpop.f32.mrb[0].mxu0
  %279 = vdwg.mxu0
  %282 = vrot.lane.b32.xlu0 %v272, 96
  %v283 = vpop.permute.xlu0 %282
  %284 = vrot.lane.b32.xlu0 %v277, 96
  %v285 = vpop.permute.xlu0 %284
  %v286 = vsel %vm198, %v272, 0
  %v288 = vsel %vm198, %v277, 0
  %v290 = vsel %vm198, %v283, 0
  %v292 = vsel %vm198, %v285, 0
  %294 = vmatprep.subr.mxu0 0.0
  %295 = vmatpush1.xpose.msra.mxu0 %v290
  %296 = vmatprep.subr.mxu0 0.0
  %297 = vmatpush1.xpose.msra.mxu0 %v292
  %298 = vmatprep.subr.mxu0 0.0
  %299 = vmatpush1.xpose.msra.mxu0 0.0
  %300 = vmatprep.subr.mxu0 0.0
  %301 = vmatpush1.xpose.msra.mxu0 0.0
  %302 = vmatprep.subr.mxu0 0.0
  %303 = vmatpush1.xpose.msra.mxu0 0.0
  %304 = vmatprep.subr.mxu0 0.0
  %305 = vmatpush1.xpose.msra.mxu0 0.0
  %306 = vmatprep.subr.mxu0 0.0
  %307 = vmatpush1.xpose.msra.mxu0 0.0
  %308 = vmatprep.subr.mxu0 0.0
  %309 = vmatpush1.xpose.msra.mxu0 0.0
  %310 = vmatprep.subr.mxu0 0.0
  %311 = vmatpush1.xpose.msra.mxu0 0.0
  %312 = vmatprep.subr.mxu0 0.0
  %313 = vmatpush1.xpose.msra.mxu0 0.0
  %314 = vmatprep.subr.mxu0 0.0
  %315 = vmatpush1.xpose.msra.mxu0 0.0
  %316 = vmatprep.subr.mxu0 0.0
  %317 = vmatpush1.xpose.msra.mxu0 0.0
  %318 = vmatprep.subr.mxu0 0.0
  %319 = vmatpush1.xpose.msra.mxu0 0.0
  %320 = vmatprep.subr.mxu0 0.0
  %321 = vmatpush1.xpose.msra.mxu0 0.0
  %322 = vmatprep.subr.mxu0 0.0
  %323 = vmatpush1.xpose.msra.mxu0 0.0
  %324 = vmatprep.subr.mxu0 0.0
  %325 = vmatpush1.xpose.msra.mxu0 0.0
  %326 = vmatprep.subr.mxu0 0.0
  %327 = vmatpush1.xpose.msra.mxu0 0.0
  %328 = vmatprep.subr.mxu0 0.0
  %329 = vmatpush1.xpose.msra.mxu0 0.0
  %330 = vmatprep.subr.mxu0 0.0
  %331 = vmatpush1.xpose.msra.mxu0 0.0
  %332 = vmatprep.subr.mxu0 0.0
  %333 = vmatpush1.xpose.msra.mxu0 0.0
  %334 = vmatprep.subr.mxu0 0.0
  %335 = vmatpush1.xpose.msra.mxu0 0.0
  %336 = vmatprep.subr.mxu0 0.0
  %337 = vmatpush1.xpose.msra.mxu0 0.0
  %338 = vmatprep.subr.mxu0 0.0
  %339 = vmatpush1.xpose.msra.mxu0 0.0
  %340 = vmatprep.subr.mxu0 0.0
  %341 = vmatpush1.xpose.msra.mxu0 0.0
  %342 = vmatprep.subr.mxu0 0.0
  %343 = vmatpush1.xpose.msra.mxu0 0.0
  %344 = vmatprep.subr.mxu0 0.0
  %345 = vmatpush1.xpose.msra.mxu0 0.0
  %346 = vmatprep.subr.mxu0 0.0
  %347 = vmatpush1.xpose.msra.mxu0 0.0
  %348 = vmatprep.subr.mxu0 0.0
  %349 = vmatpush1.xpose.msra.mxu0 0.0
  %350 = vmatprep.subr.mxu0 0.0
  %351 = vmatpush1.xpose.msra.mxu0 0.0
  %352 = vmatprep.subr.mxu0 0.0
  %353 = vmatpush1.xpose.msra.mxu0 0.0
  %354 = vmatprep.subr.mxu0 0.0
  %355 = vmatpush1.xpose.msra.mxu0 0.0
  %356 = vmatprep.subr.mxu0 0.0
  %357 = vmatpush1.xpose.msra.mxu0 0.0
  %358 = vmatprep.mubr.f32.mxu0 0.0
  %359 = vmatmul.mubr.f32.gmra.mrb[0].mxu0 %v286
  %v360 = vpop.f32.mrb[0].mxu0
  %v361 = vadd.f32 0.0, %v360
  %v362 = vpop.f32.mrb[0].mxu0
  %363 = vmatprep.mubr.f32.mxu0 0.0
  %364 = vmatmul.mubr.f32.gmra.mrb[0].mxu0 %v288
  %v365 = vpop.f32.mrb[0].mxu0
  %v366 = vadd.f32 0.0, %v365
  %v367 = vpop.f32.mrb[0].mxu0
  %368 = vdwg.mxu0
  %v369 = vmul.f32 %v361, 0.06187184
  %v370 = vmul.f32 %v366, 0.06187184
  %v371 = vtanh.pop %v129
  %v372 = vtanh.pop %v134
  %v373 = vmul.f32 %v371, 1.442695
  %v374 = vpow.pop %v373
  %v375 = vmul.f32 %v372, 1.442695
  %v376 = vpow.pop %v375
  %v377 = vmul.f32 %v374, %v371
  %v378 = vmul.f32 %v376, %v372
  %vm379 = vcmask 64512
  %v380 = vsel %vm379, %v374, 0.0
  %381 = vadd.xlane.f32.xlu0 %v380
  %v382 = vpop.xlane.xlu0 %381
  %v383 = vsel %vm379, %v376, 0.0
  %384 = vadd.xlane.f32.xlu0 %v383
  %v385 = vpop.xlane.xlu0 %384
  %v386 = vsel %vm379, %v377, 0.0
  %387 = vadd.xlane.f32.xlu0 %v386
  %v388 = vpop.xlane.xlu0 %387
  %v389 = vsel %vm379, %v378, 0.0
  %390 = vadd.xlane.f32.xlu0 %v389
  %v391 = vpop.xlane.xlu0 %390
  %v392 = vmul.f32 %v388, 0.3
  %v393 = vmul.f32 %v391, 0.3
  %v395 = vsel %vm379, 1.0, 0
  %v398 = vsel %vm379, %v374, 0
  %v401 = vsel %vm379, %v376, 0
  %403 = vmatprep.subr.mxu0 0.0
  %404 = vmatpush1.xpose.msra.mxu0 %v398
  %405 = vmatprep.subr.mxu0 0.0
  %406 = vmatpush1.xpose.msra.mxu0 %v401
  %407 = vmatprep.subr.mxu0 0.0
  %408 = vmatpush1.xpose.msra.mxu0 0.0
  %409 = vmatprep.subr.mxu0 0.0
  %410 = vmatpush1.xpose.msra.mxu0 0.0
  %411 = vmatprep.subr.mxu0 0.0
  %412 = vmatpush1.xpose.msra.mxu0 0.0
  %413 = vmatprep.subr.mxu0 0.0
  %414 = vmatpush1.xpose.msra.mxu0 0.0
  %415 = vmatprep.subr.mxu0 0.0
  %416 = vmatpush1.xpose.msra.mxu0 0.0
  %417 = vmatprep.subr.mxu0 0.0
  %418 = vmatpush1.xpose.msra.mxu0 0.0
  %419 = vmatprep.subr.mxu0 0.0
  %420 = vmatpush1.xpose.msra.mxu0 0.0
  %421 = vmatprep.subr.mxu0 0.0
  %422 = vmatpush1.xpose.msra.mxu0 0.0
  %423 = vmatprep.subr.mxu0 0.0
  %424 = vmatpush1.xpose.msra.mxu0 0.0
  %425 = vmatprep.subr.mxu0 0.0
  %426 = vmatpush1.xpose.msra.mxu0 0.0
  %427 = vmatprep.subr.mxu0 0.0
  %428 = vmatpush1.xpose.msra.mxu0 0.0
  %429 = vmatprep.subr.mxu0 0.0
  %430 = vmatpush1.xpose.msra.mxu0 0.0
  %431 = vmatprep.subr.mxu0 0.0
  %432 = vmatpush1.xpose.msra.mxu0 0.0
  %433 = vmatprep.subr.mxu0 0.0
  %434 = vmatpush1.xpose.msra.mxu0 0.0
  %435 = vmatprep.subr.mxu0 0.0
  %436 = vmatpush1.xpose.msra.mxu0 0.0
  %437 = vmatprep.subr.mxu0 0.0
  %438 = vmatpush1.xpose.msra.mxu0 0.0
  %439 = vmatprep.subr.mxu0 0.0
  %440 = vmatpush1.xpose.msra.mxu0 0.0
  %441 = vmatprep.subr.mxu0 0.0
  %442 = vmatpush1.xpose.msra.mxu0 0.0
  %443 = vmatprep.subr.mxu0 0.0
  %444 = vmatpush1.xpose.msra.mxu0 0.0
  %445 = vmatprep.subr.mxu0 0.0
  %446 = vmatpush1.xpose.msra.mxu0 0.0
  %447 = vmatprep.subr.mxu0 0.0
  %448 = vmatpush1.xpose.msra.mxu0 0.0
  %449 = vmatprep.subr.mxu0 0.0
  %450 = vmatpush1.xpose.msra.mxu0 0.0
  %451 = vmatprep.subr.mxu0 0.0
  %452 = vmatpush1.xpose.msra.mxu0 0.0
  %453 = vmatprep.subr.mxu0 0.0
  %454 = vmatpush1.xpose.msra.mxu0 0.0
  %455 = vmatprep.subr.mxu0 0.0
  %456 = vmatpush1.xpose.msra.mxu0 0.0
  %457 = vmatprep.subr.mxu0 0.0
  %458 = vmatpush1.xpose.msra.mxu0 0.0
  %459 = vmatprep.subr.mxu0 0.0
  %460 = vmatpush1.xpose.msra.mxu0 0.0
  %461 = vmatprep.subr.mxu0 0.0
  %462 = vmatpush1.xpose.msra.mxu0 0.0
  %463 = vmatprep.subr.mxu0 0.0
  %464 = vmatpush1.xpose.msra.mxu0 0.0
  %465 = vmatprep.subr.mxu0 0.0
  %466 = vmatpush1.xpose.msra.mxu0 0.0
  %467 = vmatprep.mubr.f32.mxu0 0.0
  %468 = vmatmul.mubr.f32.gmra.mrb[0].mxu0 %v395
  %v469 = vpop.f32.mrb[0].mxu0
  %v470 = vadd.f32 0.0, %v469
  %v471 = vpop.f32.mrb[0].mxu0
  %472 = vdwg.mxu0
  %v474 = vsel %vm379, 0.3, 0
  %v477 = vsel %vm379, %v377, 0
  %v480 = vsel %vm379, %v378, 0
  %482 = vmatprep.subr.mxu0 0.0
  %483 = vmatpush1.xpose.msra.mxu0 %v477
  %484 = vmatprep.subr.mxu0 0.0
  %485 = vmatpush1.xpose.msra.mxu0 %v480
  %486 = vmatprep.subr.mxu0 0.0
  %487 = vmatpush1.xpose.msra.mxu0 0.0
  %488 = vmatprep.subr.mxu0 0.0
  %489 = vmatpush1.xpose.msra.mxu0 0.0
  %490 = vmatprep.subr.mxu0 0.0
  %491 = vmatpush1.xpose.msra.mxu0 0.0
  %492 = vmatprep.subr.mxu0 0.0
  %493 = vmatpush1.xpose.msra.mxu0 0.0
  %494 = vmatprep.subr.mxu0 0.0
  %495 = vmatpush1.xpose.msra.mxu0 0.0
  %496 = vmatprep.subr.mxu0 0.0
  %497 = vmatpush1.xpose.msra.mxu0 0.0
  %498 = vmatprep.subr.mxu0 0.0
  %499 = vmatpush1.xpose.msra.mxu0 0.0
  %500 = vmatprep.subr.mxu0 0.0
  %501 = vmatpush1.xpose.msra.mxu0 0.0
  %502 = vmatprep.subr.mxu0 0.0
  %503 = vmatpush1.xpose.msra.mxu0 0.0
  %504 = vmatprep.subr.mxu0 0.0
  %505 = vmatpush1.xpose.msra.mxu0 0.0
  %506 = vmatprep.subr.mxu0 0.0
  %507 = vmatpush1.xpose.msra.mxu0 0.0
  %508 = vmatprep.subr.mxu0 0.0
  %509 = vmatpush1.xpose.msra.mxu0 0.0
  %510 = vmatprep.subr.mxu0 0.0
  %511 = vmatpush1.xpose.msra.mxu0 0.0
  %512 = vmatprep.subr.mxu0 0.0
  %513 = vmatpush1.xpose.msra.mxu0 0.0
  %514 = vmatprep.subr.mxu0 0.0
  %515 = vmatpush1.xpose.msra.mxu0 0.0
  %516 = vmatprep.subr.mxu0 0.0
  %517 = vmatpush1.xpose.msra.mxu0 0.0
  %518 = vmatprep.subr.mxu0 0.0
  %519 = vmatpush1.xpose.msra.mxu0 0.0
  %520 = vmatprep.subr.mxu0 0.0
  %521 = vmatpush1.xpose.msra.mxu0 0.0
  %522 = vmatprep.subr.mxu0 0.0
  %523 = vmatpush1.xpose.msra.mxu0 0.0
  %524 = vmatprep.subr.mxu0 0.0
  %525 = vmatpush1.xpose.msra.mxu0 0.0
  %526 = vmatprep.subr.mxu0 0.0
  %527 = vmatpush1.xpose.msra.mxu0 0.0
  %528 = vmatprep.subr.mxu0 0.0
  %529 = vmatpush1.xpose.msra.mxu0 0.0
  %530 = vmatprep.subr.mxu0 0.0
  %531 = vmatpush1.xpose.msra.mxu0 0.0
  %532 = vmatprep.subr.mxu0 0.0
  %533 = vmatpush1.xpose.msra.mxu0 0.0
  %534 = vmatprep.subr.mxu0 0.0
  %535 = vmatpush1.xpose.msra.mxu0 0.0
  %536 = vmatprep.subr.mxu0 0.0
  %537 = vmatpush1.xpose.msra.mxu0 0.0
  %538 = vmatprep.subr.mxu0 0.0
  %539 = vmatpush1.xpose.msra.mxu0 0.0
  %540 = vmatprep.subr.mxu0 0.0
  %541 = vmatpush1.xpose.msra.mxu0 0.0
  %542 = vmatprep.subr.mxu0 0.0
  %543 = vmatpush1.xpose.msra.mxu0 0.0
  %544 = vmatprep.subr.mxu0 0.0
  %545 = vmatpush1.xpose.msra.mxu0 0.0
  %546 = vmatprep.mubr.f32.mxu0 0.0
  %547 = vmatmul.mubr.f32.gmra.mrb[0].mxu0 %v474
  %v548 = vpop.f32.mrb[0].mxu0
  %v549 = vadd.f32 0.0, %v548
  %v550 = vpop.f32.mrb[0].mxu0
  %551 = vdwg.mxu0
  %v552 = vlaneseq
  %v553 = vshrl.u32 %v552, 7
  %v554 = vsub.s32 0, %v553
  %v555 = vrot.slane %v470, %v554
  %v556 = vadd.f32 %v382, %v555
  %v557 = vadd.f32 %v385, %v555
  %v558 = vlog2.pop %v556
  %v559 = vmul.f32 %v558, 0.6931472
  %v560 = vlog2.pop %v557
  %v561 = vmul.f32 %v560, 0.6931472
  %v562 = vmul.f32 %v559, 0.3
  %v563 = vmul.f32 %v561, 0.3
  %v564 = vadd.f32 %v369, %v562
  %v565 = vadd.f32 %v370, %v563
  %v566 = vlaneseq
  %v567 = vshrl.u32 %v566, 7
  %v568 = vsub.s32 0, %v567
  %v569 = vrot.slane %v549, %v568
  %v570 = vadd.f32 %v392, %v569
  %v571 = vadd.f32 %v393, %v569
  %v572 = vrcp.pop %v556
  %v573 = vmul.f32 %v570, %v572
  %v574 = vrcp.pop %v557
  %v575 = vmul.f32 %v571, %v574
  %v576 = vsub.f32 %v564, %v573
  %v577 = vsub.f32 %v565, %v575
  %v578 = vadd.f32 %v576, %v168
  %v579 = vadd.f32 %v577, %v169
  %vm580 = vcmask 130048
  %v581 = vsel %vm580, %v578, -inf
  %582 = vmax.xlane.f32.xlu0 %v581
  %v583 = vpop.xlane.xlu0 %582
  %v584 = vsel %vm580, %v579, -inf
  %585 = vmax.xlane.f32.xlu0 %v584
  %v586 = vpop.xlane.xlu0 %585
  %v587 = vsub.f32 %v578, %v583
  %v588 = vsub.f32 %v579, %v586
  %v589 = vmul.f32 %v587, 1.442695
  %v590 = vpow.pop %v589
  %v591 = vmul.f32 %v588, 1.442695
  %v592 = vpow.pop %v591
  %v593 = vsel %vm580, %v590, 0.0
  %594 = vadd.xlane.f32.xlu0 %v593
  %v595 = vpop.xlane.xlu0 %594
  %v596 = vsel %vm580, %v592, 0.0
  %597 = vadd.xlane.f32.xlu0 %v596
  %v598 = vpop.xlane.xlu0 %597
  %v599 = vrcp.pop %v595
  %v600 = vmul.f32 %v590, %v599
  %v601 = vrcp.pop %v598
  %v602 = vmul.f32 %v592, %v601
  %603 = vrot.lane.b32.xlu0 %v272, 64
  %v604 = vpop.permute.xlu0 %603
  %605 = vrot.lane.b32.xlu0 %v277, 64
  %v606 = vpop.permute.xlu0 %605
  %v610 = vsel %vm580, %v600, 0
  %v613 = vsel %vm580, %v602, 0
  %615 = vmatprep.subr.mxu0 0.0
  %616 = vmatpush1.msra.mxu0 %v604
  %617 = vmatprep.subr.mxu0 0.0
  %618 = vmatpush1.msra.mxu0 %v606
  %619 = vmatprep.subr.mxu0 0.0
  %620 = vmatpush1.msra.mxu0 0.0
  %621 = vmatprep.subr.mxu0 0.0
  %622 = vmatpush1.msra.mxu0 0.0
  %623 = vmatprep.subr.mxu0 0.0
  %624 = vmatpush1.msra.mxu0 0.0
  %625 = vmatprep.subr.mxu0 0.0
  %626 = vmatpush1.msra.mxu0 0.0
  %627 = vmatprep.subr.mxu0 0.0
  %628 = vmatpush1.msra.mxu0 0.0
  %629 = vmatprep.subr.mxu0 0.0
  %630 = vmatpush1.msra.mxu0 0.0
  %631 = vmatprep.subr.mxu0 0.0
  %632 = vmatpush1.msra.mxu0 0.0
  %633 = vmatprep.subr.mxu0 0.0
  %634 = vmatpush1.msra.mxu0 0.0
  %635 = vmatprep.subr.mxu0 0.0
  %636 = vmatpush1.msra.mxu0 0.0
  %637 = vmatprep.subr.mxu0 0.0
  %638 = vmatpush1.msra.mxu0 0.0
  %639 = vmatprep.subr.mxu0 0.0
  %640 = vmatpush1.msra.mxu0 0.0
  %641 = vmatprep.subr.mxu0 0.0
  %642 = vmatpush1.msra.mxu0 0.0
  %643 = vmatprep.subr.mxu0 0.0
  %644 = vmatpush1.msra.mxu0 0.0
  %645 = vmatprep.subr.mxu0 0.0
  %646 = vmatpush1.msra.mxu0 0.0
  %647 = vmatprep.subr.mxu0 0.0
  %648 = vmatpush1.msra.mxu0 0.0
  %649 = vmatprep.subr.mxu0 0.0
  %650 = vmatpush1.msra.mxu0 0.0
  %651 = vmatprep.subr.mxu0 0.0
  %652 = vmatpush1.msra.mxu0 0.0
  %653 = vmatprep.subr.mxu0 0.0
  %654 = vmatpush1.msra.mxu0 0.0
  %655 = vmatprep.subr.mxu0 0.0
  %656 = vmatpush1.msra.mxu0 0.0
  %657 = vmatprep.subr.mxu0 0.0
  %658 = vmatpush1.msra.mxu0 0.0
  %659 = vmatprep.subr.mxu0 0.0
  %660 = vmatpush1.msra.mxu0 0.0
  %661 = vmatprep.subr.mxu0 0.0
  %662 = vmatpush1.msra.mxu0 0.0
  %663 = vmatprep.subr.mxu0 0.0
  %664 = vmatpush1.msra.mxu0 0.0
  %665 = vmatprep.subr.mxu0 0.0
  %666 = vmatpush1.msra.mxu0 0.0
  %667 = vmatprep.subr.mxu0 0.0
  %668 = vmatpush1.msra.mxu0 0.0
  %669 = vmatprep.subr.mxu0 0.0
  %670 = vmatpush1.msra.mxu0 0.0
  %671 = vmatprep.subr.mxu0 0.0
  %672 = vmatpush1.msra.mxu0 0.0
  %673 = vmatprep.subr.mxu0 0.0
  %674 = vmatpush1.msra.mxu0 0.0
  %675 = vmatprep.subr.mxu0 0.0
  %676 = vmatpush1.msra.mxu0 0.0
  %677 = vmatprep.subr.mxu0 0.0
  %678 = vmatpush1.msra.mxu0 0.0
  %679 = vmatprep.mubr.f32.mxu0 0.0
  %680 = vmatmul.mubr.f32.gmra.mrb[0].mxu0 %v610
  %v681 = vpop.f32.mrb[0].mxu0
  %v682 = vadd.f32 0.0, %v681
  %v683 = vpop.f32.mrb[0].mxu0
  %684 = vmatprep.mubr.f32.mxu0 0.0
  %685 = vmatmul.mubr.f32.gmra.mrb[0].mxu0 %v613
  %v686 = vpop.f32.mrb[0].mxu0
  %v687 = vadd.f32 0.0, %v686
  %v688 = vpop.f32.mrb[0].mxu0
  %689 = vdwg.mxu0
  %v690 = vlaneseq
  %v691 = vshrl.u32 %v690, 7
  %v692 = vsub.s32 0, %v691
  %v693 = vrot.slane %v188, %v692
  %v695 = vsel %vm198, %v682, 0
  %v698 = vsel %vm198, %v687, 0
  %700 = vmatprep.subr.mxu0 0.0
  %701 = vmatpush1.msra.mxu0 %v184
  %702 = vmatprep.subr.mxu0 0.0
  %703 = vmatpush1.msra.mxu0 %v185
  %704 = vmatprep.subr.mxu0 0.0
  %705 = vmatpush1.msra.mxu0 %v186
  %706 = vmatprep.subr.mxu0 0.0
  %707 = vmatpush1.msra.mxu0 %v187
  %708 = vmatprep.subr.mxu0 0.0
  %709 = vmatpush1.msra.mxu0 0.0
  %710 = vmatprep.subr.mxu0 0.0
  %711 = vmatpush1.msra.mxu0 0.0
  %712 = vmatprep.subr.mxu0 0.0
  %713 = vmatpush1.msra.mxu0 0.0
  %714 = vmatprep.subr.mxu0 0.0
  %715 = vmatpush1.msra.mxu0 0.0
  %716 = vmatprep.subr.mxu0 0.0
  %717 = vmatpush1.msra.mxu0 0.0
  %718 = vmatprep.subr.mxu0 0.0
  %719 = vmatpush1.msra.mxu0 0.0
  %720 = vmatprep.subr.mxu0 0.0
  %721 = vmatpush1.msra.mxu0 0.0
  %722 = vmatprep.subr.mxu0 0.0
  %723 = vmatpush1.msra.mxu0 0.0
  %724 = vmatprep.subr.mxu0 0.0
  %725 = vmatpush1.msra.mxu0 0.0
  %726 = vmatprep.subr.mxu0 0.0
  %727 = vmatpush1.msra.mxu0 0.0
  %728 = vmatprep.subr.mxu0 0.0
  %729 = vmatpush1.msra.mxu0 0.0
  %730 = vmatprep.subr.mxu0 0.0
  %731 = vmatpush1.msra.mxu0 0.0
  %732 = vmatprep.subr.mxu0 0.0
  %733 = vmatpush1.msra.mxu0 0.0
  %734 = vmatprep.subr.mxu0 0.0
  %735 = vmatpush1.msra.mxu0 0.0
  %736 = vmatprep.subr.mxu0 0.0
  %737 = vmatpush1.msra.mxu0 0.0
  %738 = vmatprep.subr.mxu0 0.0
  %739 = vmatpush1.msra.mxu0 0.0
  %740 = vmatprep.subr.mxu0 0.0
  %741 = vmatpush1.msra.mxu0 0.0
  %742 = vmatprep.subr.mxu0 0.0
  %743 = vmatpush1.msra.mxu0 0.0
  %744 = vmatprep.subr.mxu0 0.0
  %745 = vmatpush1.msra.mxu0 0.0
  %746 = vmatprep.subr.mxu0 0.0
  %747 = vmatpush1.msra.mxu0 0.0
  %748 = vmatprep.subr.mxu0 0.0
  %749 = vmatpush1.msra.mxu0 0.0
  %750 = vmatprep.subr.mxu0 0.0
  %751 = vmatpush1.msra.mxu0 0.0
  %752 = vmatprep.subr.mxu0 0.0
  %753 = vmatpush1.msra.mxu0 0.0
  %754 = vmatprep.subr.mxu0 0.0
  %755 = vmatpush1.msra.mxu0 0.0
  %756 = vmatprep.subr.mxu0 0.0
  %757 = vmatpush1.msra.mxu0 0.0
  %758 = vmatprep.subr.mxu0 0.0
  %759 = vmatpush1.msra.mxu0 0.0
  %760 = vmatprep.subr.mxu0 0.0
  %761 = vmatpush1.msra.mxu0 0.0
  %762 = vmatprep.subr.mxu0 0.0
  %763 = vmatpush1.msra.mxu0 0.0
  %764 = vmatprep.mubr.f32.mxu0 0.0
  %765 = vmatmul.mubr.f32.gmra.mrb[0].mxu0 %v695
  %v766 = vpop.f32.mrb[0].mxu0
  %v767 = vadd.f32 %v693, %v766
  %v768 = vpop.f32.mrb[0].mxu0
  %769 = vmatprep.mubr.f32.mxu0 0.0
  %770 = vmatmul.mubr.f32.gmra.mrb[0].mxu0 %v698
  %v771 = vpop.f32.mrb[0].mxu0
  %v772 = vadd.f32 %v693, %v771
  %v773 = vpop.f32.mrb[0].mxu0
  %774 = vdwg.mxu0
  %v775 = vadd.f32 %v129, %v767
  %v776 = vadd.f32 %v134, %v772
  %v777 = vsel %vm198, %v775, 0.0
  %778 = vadd.xlane.f32.xlu0 %v777
  %v779 = vpop.xlane.xlu0 %778
  %v780 = vsel %vm198, %v776, 0.0
  %781 = vadd.xlane.f32.xlu0 %v780
  %v782 = vpop.xlane.xlu0 %781
  %v783 = vrcp.pop 32.0
  %v784 = vmul.f32 %v779, %v783
  %v785 = vmul.f32 %v782, %v783
  %v786 = vsub.f32 %v775, %v784
  %v787 = vsub.f32 %v776, %v785
  %v788 = vmul.f32 %v786, %v786
  %v789 = vmul.f32 %v787, %v787
  %v790 = vsel %vm198, %v788, 0.0
  %791 = vadd.xlane.f32.xlu0 %v790
  %v792 = vpop.xlane.xlu0 %791
  %v793 = vsel %vm198, %v789, 0.0
  %794 = vadd.xlane.f32.xlu0 %v793
  %v795 = vpop.xlane.xlu0 %794
  %v796 = vmul.f32 %v792, %v783
  %v797 = vmul.f32 %v795, %v783
  %v798 = vadd.f32 %v796, 1e-05
  %v799 = vadd.f32 %v797, 1e-05
  %v800 = vrsqrt.pop %v798
  %v801 = vrsqrt.pop %v799
  %v802 = vmul.f32 %v786, %v800
  %v803 = vmul.f32 %v787, %v801
  %v804 = vlaneseq
  %v805 = vshrl.u32 %v804, 7
  %v806 = vsub.s32 0, %v805
  %v807 = vrot.slane %v190, %v806
  %v808 = vmul.f32 %v802, %v807
  %v809 = vmul.f32 %v803, %v807
  %v810 = vlaneseq
  %v811 = vshrl.u32 %v810, 7
  %v812 = vsub.s32 0, %v811
  %v813 = vrot.slane %v191, %v812
  %v814 = vadd.f32 %v808, %v813
  %v815 = vadd.f32 %v809, %v813
  %v816 = vlaneseq
  %v817 = vshrl.u32 %v816, 7
  %v818 = vsub.s32 0, %v817
  %v819 = vrot.slane %v183, %v818
  %v821 = vsel %vm198, %v814, 0
  %v824 = vsel %vm198, %v815, 0
  %826 = vmatprep.subr.mxu0 0.0
  %827 = vmatpush1.msra.mxu0 %v174
  %828 = vmatprep.subr.mxu0 0.0
  %829 = vmatpush1.msra.mxu0 %v175
  %830 = vmatprep.subr.mxu0 0.0
  %831 = vmatpush1.msra.mxu0 %v176
  %832 = vmatprep.subr.mxu0 0.0
  %833 = vmatpush1.msra.mxu0 %v177
  %834 = vmatprep.subr.mxu0 0.0
  %835 = vmatpush1.msra.mxu0 0.0
  %836 = vmatprep.subr.mxu0 0.0
  %837 = vmatpush1.msra.mxu0 0.0
  %838 = vmatprep.subr.mxu0 0.0
  %839 = vmatpush1.msra.mxu0 0.0
  %840 = vmatprep.subr.mxu0 0.0
  %841 = vmatpush1.msra.mxu0 0.0
  %842 = vmatprep.subr.mxu0 0.0
  %843 = vmatpush1.msra.mxu0 0.0
  %844 = vmatprep.subr.mxu0 0.0
  %845 = vmatpush1.msra.mxu0 0.0
  %846 = vmatprep.subr.mxu0 0.0
  %847 = vmatpush1.msra.mxu0 0.0
  %848 = vmatprep.subr.mxu0 0.0
  %849 = vmatpush1.msra.mxu0 0.0
  %850 = vmatprep.subr.mxu0 0.0
  %851 = vmatpush1.msra.mxu0 0.0
  %852 = vmatprep.subr.mxu0 0.0
  %853 = vmatpush1.msra.mxu0 0.0
  %854 = vmatprep.subr.mxu0 0.0
  %855 = vmatpush1.msra.mxu0 0.0
  %856 = vmatprep.subr.mxu0 0.0
  %857 = vmatpush1.msra.mxu0 0.0
  %858 = vmatprep.subr.mxu0 0.0
  %859 = vmatpush1.msra.mxu0 0.0
  %860 = vmatprep.subr.mxu0 0.0
  %861 = vmatpush1.msra.mxu0 0.0
  %862 = vmatprep.subr.mxu0 0.0
  %863 = vmatpush1.msra.mxu0 0.0
  %864 = vmatprep.subr.mxu0 0.0
  %865 = vmatpush1.msra.mxu0 0.0
  %866 = vmatprep.subr.mxu0 0.0
  %867 = vmatpush1.msra.mxu0 0.0
  %868 = vmatprep.subr.mxu0 0.0
  %869 = vmatpush1.msra.mxu0 0.0
  %870 = vmatprep.subr.mxu0 0.0
  %871 = vmatpush1.msra.mxu0 0.0
  %872 = vmatprep.subr.mxu0 0.0
  %873 = vmatpush1.msra.mxu0 0.0
  %874 = vmatprep.subr.mxu0 0.0
  %875 = vmatpush1.msra.mxu0 0.0
  %876 = vmatprep.subr.mxu0 0.0
  %877 = vmatpush1.msra.mxu0 0.0
  %878 = vmatprep.subr.mxu0 0.0
  %879 = vmatpush1.msra.mxu0 0.0
  %880 = vmatprep.subr.mxu0 0.0
  %881 = vmatpush1.msra.mxu0 0.0
  %882 = vmatprep.subr.mxu0 0.0
  %883 = vmatpush1.msra.mxu0 0.0
  %884 = vmatprep.subr.mxu0 0.0
  %885 = vmatpush1.msra.mxu0 0.0
  %886 = vmatprep.subr.mxu0 0.0
  %887 = vmatpush1.msra.mxu0 0.0
  %888 = vmatprep.subr.mxu0 0.0
  %889 = vmatpush1.msra.mxu0 0.0
  %890 = vmatprep.mubr.f32.mxu0 0.0
  %891 = vmatmul.mubr.f32.gmra.mrb[0].mxu0 %v821
  %v892 = vpop.f32.mrb[0].mxu0
  %v893 = vadd.f32 %v819, %v892
  %v894 = vpop.f32.mrb[0].mxu0
  %895 = vmatprep.mubr.f32.mxu0 0.0
  %896 = vmatmul.mubr.f32.gmra.mrb[0].mxu0 %v824
  %v897 = vpop.f32.mrb[0].mxu0
  %v898 = vadd.f32 %v819, %v897
  %v899 = vpop.f32.mrb[0].mxu0
  %900 = vdwg.mxu0
  %v901 = vmax.f32 %v893, 0.0
  %v902 = vmax.f32 %v898, 0.0
  %v903 = vlaneseq
  %v904 = vshrl.u32 %v903, 7
  %v905 = vsub.s32 0, %v904
  %v906 = vrot.slane %v189, %v905
  %907 = vmatprep.subr.mxu0 0.0
  %908 = vmatpush1.xpose.msra.mxu0 %v178
  %909 = vmatprep.subr.mxu0 0.0
  %910 = vmatpush1.xpose.msra.mxu0 %v179
  %911 = vmatprep.subr.mxu0 0.0
  %912 = vmatpush1.xpose.msra.mxu0 %v180
  %913 = vmatprep.subr.mxu0 0.0
  %914 = vmatpush1.xpose.msra.mxu0 %v181
  %915 = vmatprep.subr.mxu0 0.0
  %916 = vmatpush1.xpose.msra.mxu0 0.0
  %917 = vmatprep.subr.mxu0 0.0
  %918 = vmatpush1.xpose.msra.mxu0 0.0
  %919 = vmatprep.subr.mxu0 0.0
  %920 = vmatpush1.xpose.msra.mxu0 0.0
  %921 = vmatprep.subr.mxu0 0.0
  %922 = vmatpush1.xpose.msra.mxu0 0.0
  %923 = vmatprep.subr.mxu0 0.0
  %924 = vmatpush1.xpose.msra.mxu0 0.0
  %925 = vmatprep.subr.mxu0 0.0
  %926 = vmatpush1.xpose.msra.mxu0 0.0
  %927 = vmatprep.subr.mxu0 0.0
  %928 = vmatpush1.xpose.msra.mxu0 0.0
  %929 = vmatprep.subr.mxu0 0.0
  %930 = vmatpush1.xpose.msra.mxu0 0.0
  %931 = vmatprep.subr.mxu0 0.0
  %932 = vmatpush1.xpose.msra.mxu0 0.0
  %933 = vmatprep.subr.mxu0 0.0
  %934 = vmatpush1.xpose.msra.mxu0 0.0
  %935 = vmatprep.subr.mxu0 0.0
  %936 = vmatpush1.xpose.msra.mxu0 0.0
  %937 = vmatprep.subr.mxu0 0.0
  %938 = vmatpush1.xpose.msra.mxu0 0.0
  %939 = vmatprep.subr.mxu0 0.0
  %940 = vmatpush1.xpose.msra.mxu0 0.0
  %941 = vmatprep.subr.mxu0 0.0
  %942 = vmatpush1.xpose.msra.mxu0 0.0
  %943 = vmatprep.subr.mxu0 0.0
  %944 = vmatpush1.xpose.msra.mxu0 0.0
  %945 = vmatprep.subr.mxu0 0.0
  %946 = vmatpush1.xpose.msra.mxu0 0.0
  %947 = vmatprep.subr.mxu0 0.0
  %948 = vmatpush1.xpose.msra.mxu0 0.0
  %949 = vmatprep.subr.mxu0 0.0
  %950 = vmatpush1.xpose.msra.mxu0 0.0
  %951 = vmatprep.subr.mxu0 0.0
  %952 = vmatpush1.xpose.msra.mxu0 0.0
  %953 = vmatprep.subr.mxu0 0.0
  %954 = vmatpush1.xpose.msra.mxu0 0.0
  %955 = vmatprep.subr.mxu0 0.0
  %956 = vmatpush1.xpose.msra.mxu0 0.0
  %957 = vmatprep.subr.mxu0 0.0
  %958 = vmatpush1.xpose.msra.mxu0 0.0
  %959 = vmatprep.subr.mxu0 0.0
  %960 = vmatpush1.xpose.msra.mxu0 0.0
  %961 = vmatprep.subr.mxu0 0.0
  %962 = vmatpush1.xpose.msra.mxu0 0.0
  %963 = vmatprep.subr.mxu0 0.0
  %964 = vmatpush1.xpose.msra.mxu0 0.0
  %965 = vmatprep.subr.mxu0 0.0
  %966 = vmatpush1.xpose.msra.mxu0 0.0
  %967 = vmatprep.subr.mxu0 0.0
  %968 = vmatpush1.xpose.msra.mxu0 0.0
  %969 = vmatprep.subr.mxu0 0.0
  %970 = vmatpush1.xpose.msra.mxu0 0.0
  %971 = vmatprep.mubr.f32.mxu0 0.0
  %972 = vmatmul.mubr.f32.gmra.mrb[0].mxu0 %v901
  %v973 = vpop.f32.mrb[0].mxu0
  %v974 = vadd.f32 %v906, %v973
  %v975 = vpop.f32.mrb[0].mxu0
  %976 = vmatprep.mubr.f32.mxu0 0.0
  %977 = vmatmul.mubr.f32.gmra.mrb[0].mxu0 %v902
  %v978 = vpop.f32.mrb[0].mxu0
  %v979 = vadd.f32 %v906, %v978
  %v980 = vpop.f32.mrb[0].mxu0
  %981 = vdwg.mxu0
  %v982 = vadd.f32 %v814, %v974
  %v983 = vadd.f32 %v815, %v979
  %v984 = vsel %vm198, %v982, 0.0
  %985 = vadd.xlane.f32.xlu0 %v984
  %v986 = vpop.xlane.xlu0 %985
  %v987 = vsel %vm198, %v983, 0.0
  %988 = vadd.xlane.f32.xlu0 %v987
  %v989 = vpop.xlane.xlu0 %988
  %v990 = vmul.f32 %v986, %v783
  %v991 = vmul.f32 %v989, %v783
  %v992 = vsub.f32 %v982, %v990
  %v993 = vsub.f32 %v983, %v991
  %v994 = vmul.f32 %v992, %v992
  %v995 = vmul.f32 %v993, %v993
  %v996 = vsel %vm198, %v994, 0.0
  %997 = vadd.xlane.f32.xlu0 %v996
  %v998 = vpop.xlane.xlu0 %997
  %v999 = vsel %vm198, %v995, 0.0
  %1000 = vadd.xlane.f32.xlu0 %v999
  %v1001 = vpop.xlane.xlu0 %1000
  %v1002 = vmul.f32 %v998, %v783
  %v1003 = vmul.f32 %v1001, %v783
  %v1004 = vadd.f32 %v1002, 1e-05
  %v1005 = vadd.f32 %v1003, 1e-05
  %v1006 = vrsqrt.pop %v1004
  %v1007 = vrsqrt.pop %v1005
  %v1008 = vmul.f32 %v992, %v1006
  %v1009 = vmul.f32 %v993, %v1007
  %v1010 = vlaneseq
  %v1011 = vshrl.u32 %v1010, 7
  %v1012 = vsub.s32 0, %v1011
  %v1013 = vrot.slane %v192, %v1012
  %v1014 = vmul.f32 %v1008, %v1013
  %v1015 = vmul.f32 %v1009, %v1013
  %v1016 = vlaneseq
  %v1017 = vshrl.u32 %v1016, 7
  %v1018 = vsub.s32 0, %v1017
  %v1019 = vrot.slane %v193, %v1018
  %v1020 = vadd.f32 %v1014, %v1019
  %v1021 = vadd.f32 %v1015, %v1019
  %s1022 = scalar_lea.vmem %s3, 104
  %v1023 = vld [vmem:[%s1022] sm:$0xff]
  %v1024 = vld [vmem:[%s1022 + $0x8] sm:$0xff]
  %v1025 = vld [vmem:[%s1022 + $0x10] sm:$0xff]
  %v1026 = vld [vmem:[%s1022 + $0x18] sm:$0xff]
  %v1027 = vld [vmem:[%s1022 + $0x20] sm:$0xff]
  %v1028 = vld [vmem:[%s1022 + $0x28] sm:$0xff]
  %v1029 = vld [vmem:[%s1022 + $0x30] sm:$0xff]
  %v1030 = vld [vmem:[%s1022 + $0x38] sm:$0xff]
  %v1031 = vld [vmem:[%s1022 + $0x40] sm:$0xff]
  %v1032 = vld [vmem:[%s1022 + $0x48] sm:$0xff]
  %v1033 = vld [vmem:[%s1022 + $0x50] sm:$0xff]
  %v1034 = vld [vmem:[%s1022 + $0x58] sm:$0xff]
  %v1035 = vld [vmem:[%s1022 + $0x60] sm:$0x1]
  %v1036 = vld [vmem:[%s1022 + $0x61] sm:$0x1]
  %v1037 = vld [vmem:[%s1 + $0x138] sm:$0xff]
  %v1038 = vld [vmem:[%s1 + $0x140] sm:$0xff]
  %v1039 = vld [vmem:[%s1 + $0x148] sm:$0xff]
  %v1040 = vld [vmem:[%s1 + $0x150] sm:$0xff]
  %v1041 = vld [vmem:[%s1 + $0x158] sm:$0x1]
  %v1042 = vld [vmem:[%s1 + $0x159] sm:$0x1]
  %v1043 = vld [vmem:[%s1 + $0x15a] sm:$0x1]
  %v1044 = vld [vmem:[%s1 + $0x15b] sm:$0x1]
  %v1045 = vld [vmem:[%s1 + $0x15c] sm:$0x1]
  %v1046 = vld [vmem:[%s1 + $0x15d] sm:$0x1]
  %v1047 = vlaneseq
  %v1048 = vshrl.u32 %v1047, 7
  %v1049 = vsub.s32 0, %v1048
  %v1050 = vrot.slane %v1035, %v1049
  %v1052 = vsel %vm198, %v1020, 0
  %v1055 = vsel %vm198, %v1021, 0
  %1057 = vmatprep.subr.mxu0 0.0
  %1058 = vmatpush1.msra.mxu0 %v1023
  %1059 = vmatprep.subr.mxu0 0.0
  %1060 = vmatpush1.msra.mxu0 %v1024
  %1061 = vmatprep.subr.mxu0 0.0
  %1062 = vmatpush1.msra.mxu0 %v1025
  %1063 = vmatprep.subr.mxu0 0.0
  %1064 = vmatpush1.msra.mxu0 %v1026
  %1065 = vmatprep.subr.mxu0 0.0
  %1066 = vmatpush1.msra.mxu0 0.0
  %1067 = vmatprep.subr.mxu0 0.0
  %1068 = vmatpush1.msra.mxu0 0.0
  %1069 = vmatprep.subr.mxu0 0.0
  %1070 = vmatpush1.msra.mxu0 0.0
  %1071 = vmatprep.subr.mxu0 0.0
  %1072 = vmatpush1.msra.mxu0 0.0
  %1073 = vmatprep.subr.mxu0 0.0
  %1074 = vmatpush1.msra.mxu0 0.0
  %1075 = vmatprep.subr.mxu0 0.0
  %1076 = vmatpush1.msra.mxu0 0.0
  %1077 = vmatprep.subr.mxu0 0.0
  %1078 = vmatpush1.msra.mxu0 0.0
  %1079 = vmatprep.subr.mxu0 0.0
  %1080 = vmatpush1.msra.mxu0 0.0
  %1081 = vmatprep.subr.mxu0 0.0
  %1082 = vmatpush1.msra.mxu0 0.0
  %1083 = vmatprep.subr.mxu0 0.0
  %1084 = vmatpush1.msra.mxu0 0.0
  %1085 = vmatprep.subr.mxu0 0.0
  %1086 = vmatpush1.msra.mxu0 0.0
  %1087 = vmatprep.subr.mxu0 0.0
  %1088 = vmatpush1.msra.mxu0 0.0
  %1089 = vmatprep.subr.mxu0 0.0
  %1090 = vmatpush1.msra.mxu0 0.0
  %1091 = vmatprep.subr.mxu0 0.0
  %1092 = vmatpush1.msra.mxu0 0.0
  %1093 = vmatprep.subr.mxu0 0.0
  %1094 = vmatpush1.msra.mxu0 0.0
  %1095 = vmatprep.subr.mxu0 0.0
  %1096 = vmatpush1.msra.mxu0 0.0
  %1097 = vmatprep.subr.mxu0 0.0
  %1098 = vmatpush1.msra.mxu0 0.0
  %1099 = vmatprep.subr.mxu0 0.0
  %1100 = vmatpush1.msra.mxu0 0.0
  %1101 = vmatprep.subr.mxu0 0.0
  %1102 = vmatpush1.msra.mxu0 0.0
  %1103 = vmatprep.subr.mxu0 0.0
  %1104 = vmatpush1.msra.mxu0 0.0
  %1105 = vmatprep.subr.mxu0 0.0
  %1106 = vmatpush1.msra.mxu0 0.0
  %1107 = vmatprep.subr.mxu0 0.0
  %1108 = vmatpush1.msra.mxu0 0.0
  %1109 = vmatprep.subr.mxu0 0.0
  %1110 = vmatpush1.msra.mxu0 0.0
  %1111 = vmatprep.subr.mxu0 0.0
  %1112 = vmatpush1.msra.mxu0 0.0
  %1113 = vmatprep.subr.mxu0 0.0
  %1114 = vmatpush1.msra.mxu0 0.0
  %1115 = vmatprep.subr.mxu0 0.0
  %1116 = vmatpush1.msra.mxu0 0.0
  %1117 = vmatprep.subr.mxu0 0.0
  %1118 = vmatpush1.msra.mxu0 0.0
  %1119 = vmatprep.subr.mxu0 0.0
  %1120 = vmatpush1.msra.mxu0 0.0
  %1121 = vmatprep.mubr.f32.mxu0 0.0
  %1122 = vmatmul.mubr.f32.gmra.mrb[0].mxu0 %v1052
  %v1123 = vpop.f32.mrb[0].mxu0
  %v1124 = vadd.f32 %v1050, %v1123
  %v1125 = vpop.f32.mrb[0].mxu0
  %1126 = vmatprep.mubr.f32.mxu0 0.0
  %1127 = vmatmul.mubr.f32.gmra.mrb[0].mxu0 %v1055
  %v1128 = vpop.f32.mrb[0].mxu0
  %v1129 = vadd.f32 %v1050, %v1128
  %v1130 = vpop.f32.mrb[0].mxu0
  %1131 = vdwg.mxu0
  %1134 = vrot.lane.b32.xlu0 %v1124, 96
  %v1135 = vpop.permute.xlu0 %1134
  %1136 = vrot.lane.b32.xlu0 %v1129, 96
  %v1137 = vpop.permute.xlu0 %1136
  %v1138 = vsel %vm198, %v1124, 0
  %v1140 = vsel %vm198, %v1129, 0
  %v1142 = vsel %vm198, %v1135, 0
  %v1144 = vsel %vm198, %v1137, 0
  %1146 = vmatprep.subr.mxu0 0.0
  %1147 = vmatpush1.xpose.msra.mxu0 %v1142
  %1148 = vmatprep.subr.mxu0 0.0
  %1149 = vmatpush1.xpose.msra.mxu0 %v1144
  %1150 = vmatprep.subr.mxu0 0.0
  %1151 = vmatpush1.xpose.msra.mxu0 0.0
  %1152 = vmatprep.subr.mxu0 0.0
  %1153 = vmatpush1.xpose.msra.mxu0 0.0
  %1154 = vmatprep.subr.mxu0 0.0
  %1155 = vmatpush1.xpose.msra.mxu0 0.0
  %1156 = vmatprep.subr.mxu0 0.0
  %1157 = vmatpush1.xpose.msra.mxu0 0.0
  %1158 = vmatprep.subr.mxu0 0.0
  %1159 = vmatpush1.xpose.msra.mxu0 0.0
  %1160 = vmatprep.subr.mxu0 0.0
  %1161 = vmatpush1.xpose.msra.mxu0 0.0
  %1162 = vmatprep.subr.mxu0 0.0
  %1163 = vmatpush1.xpose.msra.mxu0 0.0
  %1164 = vmatprep.subr.mxu0 0.0
  %1165 = vmatpush1.xpose.msra.mxu0 0.0
  %1166 = vmatprep.subr.mxu0 0.0
  %1167 = vmatpush1.xpose.msra.mxu0 0.0
  %1168 = vmatprep.subr.mxu0 0.0
  %1169 = vmatpush1.xpose.msra.mxu0 0.0
  %1170 = vmatprep.subr.mxu0 0.0
  %1171 = vmatpush1.xpose.msra.mxu0 0.0
  %1172 = vmatprep.subr.mxu0 0.0
  %1173 = vmatpush1.xpose.msra.mxu0 0.0
  %1174 = vmatprep.subr.mxu0 0.0
  %1175 = vmatpush1.xpose.msra.mxu0 0.0
  %1176 = vmatprep.subr.mxu0 0.0
  %1177 = vmatpush1.xpose.msra.mxu0 0.0
  %1178 = vmatprep.subr.mxu0 0.0
  %1179 = vmatpush1.xpose.msra.mxu0 0.0
  %1180 = vmatprep.subr.mxu0 0.0
  %1181 = vmatpush1.xpose.msra.mxu0 0.0
  %1182 = vmatprep.subr.mxu0 0.0
  %1183 = vmatpush1.xpose.msra.mxu0 0.0
  %1184 = vmatprep.subr.mxu0 0.0
  %1185 = vmatpush1.xpose.msra.mxu0 0.0
  %1186 = vmatprep.subr.mxu0 0.0
  %1187 = vmatpush1.xpose.msra.mxu0 0.0
  %1188 = vmatprep.subr.mxu0 0.0
  %1189 = vmatpush1.xpose.msra.mxu0 0.0
  %1190 = vmatprep.subr.mxu0 0.0
  %1191 = vmatpush1.xpose.msra.mxu0 0.0
  %1192 = vmatprep.subr.mxu0 0.0
  %1193 = vmatpush1.xpose.msra.mxu0 0.0
  %1194 = vmatprep.subr.mxu0 0.0
  %1195 = vmatpush1.xpose.msra.mxu0 0.0
  %1196 = vmatprep.subr.mxu0 0.0
  %1197 = vmatpush1.xpose.msra.mxu0 0.0
  %1198 = vmatprep.subr.mxu0 0.0
  %1199 = vmatpush1.xpose.msra.mxu0 0.0
  %1200 = vmatprep.subr.mxu0 0.0
  %1201 = vmatpush1.xpose.msra.mxu0 0.0
  %1202 = vmatprep.subr.mxu0 0.0
  %1203 = vmatpush1.xpose.msra.mxu0 0.0
  %1204 = vmatprep.subr.mxu0 0.0
  %1205 = vmatpush1.xpose.msra.mxu0 0.0
  %1206 = vmatprep.subr.mxu0 0.0
  %1207 = vmatpush1.xpose.msra.mxu0 0.0
  %1208 = vmatprep.subr.mxu0 0.0
  %1209 = vmatpush1.xpose.msra.mxu0 0.0
  %1210 = vmatprep.mubr.f32.mxu0 0.0
  %1211 = vmatmul.mubr.f32.gmra.mrb[0].mxu0 %v1138
  %v1212 = vpop.f32.mrb[0].mxu0
  %v1213 = vadd.f32 0.0, %v1212
  %v1214 = vpop.f32.mrb[0].mxu0
  %1215 = vmatprep.mubr.f32.mxu0 0.0
  %1216 = vmatmul.mubr.f32.gmra.mrb[0].mxu0 %v1140
  %v1217 = vpop.f32.mrb[0].mxu0
  %v1218 = vadd.f32 0.0, %v1217
  %v1219 = vpop.f32.mrb[0].mxu0
  %1220 = vdwg.mxu0
  %v1221 = vmul.f32 %v1213, 0.06187184
  %v1222 = vmul.f32 %v1218, 0.06187184
  %v1223 = vtanh.pop %v1020
  %v1224 = vtanh.pop %v1021
  %v1225 = vmul.f32 %v1223, 1.442695
  %v1226 = vpow.pop %v1225
  %v1227 = vmul.f32 %v1224, 1.442695
  %v1228 = vpow.pop %v1227
  %v1229 = vmul.f32 %v1226, %v1223
  %v1230 = vmul.f32 %v1228, %v1224
  %v1231 = vsel %vm379, %v1226, 0.0
  %1232 = vadd.xlane.f32.xlu0 %v1231
  %v1233 = vpop.xlane.xlu0 %1232
  %v1234 = vsel %vm379, %v1228, 0.0
  %1235 = vadd.xlane.f32.xlu0 %v1234
  %v1236 = vpop.xlane.xlu0 %1235
  %v1237 = vsel %vm379, %v1229, 0.0
  %1238 = vadd.xlane.f32.xlu0 %v1237
  %v1239 = vpop.xlane.xlu0 %1238
  %v1240 = vsel %vm379, %v1230, 0.0
  %1241 = vadd.xlane.f32.xlu0 %v1240
  %v1242 = vpop.xlane.xlu0 %1241
  %v1243 = vmul.f32 %v1239, 0.3
  %v1244 = vmul.f32 %v1242, 0.3
  %v1246 = vsel %vm379, %v1226, 0
  %v1249 = vsel %vm379, %v1228, 0
  %1251 = vmatprep.subr.mxu0 0.0
  %1252 = vmatpush1.xpose.msra.mxu0 %v1246
  %1253 = vmatprep.subr.mxu0 0.0
  %1254 = vmatpush1.xpose.msra.mxu0 %v1249
  %1255 = vmatprep.subr.mxu0 0.0
  %1256 = vmatpush1.xpose.msra.mxu0 0.0
  %1257 = vmatprep.subr.mxu0 0.0
  %1258 = vmatpush1.xpose.msra.mxu0 0.0
  %1259 = vmatprep.subr.mxu0 0.0
  %1260 = vmatpush1.xpose.msra.mxu0 0.0
  %1261 = vmatprep.subr.mxu0 0.0
  %1262 = vmatpush1.xpose.msra.mxu0 0.0
  %1263 = vmatprep.subr.mxu0 0.0
  %1264 = vmatpush1.xpose.msra.mxu0 0.0
  %1265 = vmatprep.subr.mxu0 0.0
  %1266 = vmatpush1.xpose.msra.mxu0 0.0
  %1267 = vmatprep.subr.mxu0 0.0
  %1268 = vmatpush1.xpose.msra.mxu0 0.0
  %1269 = vmatprep.subr.mxu0 0.0
  %1270 = vmatpush1.xpose.msra.mxu0 0.0
  %1271 = vmatprep.subr.mxu0 0.0
  %1272 = vmatpush1.xpose.msra.mxu0 0.0
  %1273 = vmatprep.subr.mxu0 0.0
  %1274 = vmatpush1.xpose.msra.mxu0 0.0
  %1275 = vmatprep.subr.mxu0 0.0
  %1276 = vmatpush1.xpose.msra.mxu0 0.0
  %1277 = vmatprep.subr.mxu0 0.0
  %1278 = vmatpush1.xpose.msra.mxu0 0.0
  %1279 = vmatprep.subr.mxu0 0.0
  %1280 = vmatpush1.xpose.msra.mxu0 0.0
  %1281 = vmatprep.subr.mxu0 0.0
  %1282 = vmatpush1.xpose.msra.mxu0 0.0
  %1283 = vmatprep.subr.mxu0 0.0
  %1284 = vmatpush1.xpose.msra.mxu0 0.0
  %1285 = vmatprep.subr.mxu0 0.0
  %1286 = vmatpush1.xpose.msra.mxu0 0.0
  %1287 = vmatprep.subr.mxu0 0.0
  %1288 = vmatpush1.xpose.msra.mxu0 0.0
  %1289 = vmatprep.subr.mxu0 0.0
  %1290 = vmatpush1.xpose.msra.mxu0 0.0
  %1291 = vmatprep.subr.mxu0 0.0
  %1292 = vmatpush1.xpose.msra.mxu0 0.0
  %1293 = vmatprep.subr.mxu0 0.0
  %1294 = vmatpush1.xpose.msra.mxu0 0.0
  %1295 = vmatprep.subr.mxu0 0.0
  %1296 = vmatpush1.xpose.msra.mxu0 0.0
  %1297 = vmatprep.subr.mxu0 0.0
  %1298 = vmatpush1.xpose.msra.mxu0 0.0
  %1299 = vmatprep.subr.mxu0 0.0
  %1300 = vmatpush1.xpose.msra.mxu0 0.0
  %1301 = vmatprep.subr.mxu0 0.0
  %1302 = vmatpush1.xpose.msra.mxu0 0.0
  %1303 = vmatprep.subr.mxu0 0.0
  %1304 = vmatpush1.xpose.msra.mxu0 0.0
  %1305 = vmatprep.subr.mxu0 0.0
  %1306 = vmatpush1.xpose.msra.mxu0 0.0
  %1307 = vmatprep.subr.mxu0 0.0
  %1308 = vmatpush1.xpose.msra.mxu0 0.0
  %1309 = vmatprep.subr.mxu0 0.0
  %1310 = vmatpush1.xpose.msra.mxu0 0.0
  %1311 = vmatprep.subr.mxu0 0.0
  %1312 = vmatpush1.xpose.msra.mxu0 0.0
  %1313 = vmatprep.subr.mxu0 0.0
  %1314 = vmatpush1.xpose.msra.mxu0 0.0
  %1315 = vmatprep.mubr.f32.mxu0 0.0
  %1316 = vmatmul.mubr.f32.gmra.mrb[0].mxu0 %v395
  %v1317 = vpop.f32.mrb[0].mxu0
  %v1318 = vadd.f32 0.0, %v1317
  %v1319 = vpop.f32.mrb[0].mxu0
  %1320 = vdwg.mxu0
  %v1322 = vsel %vm379, %v1229, 0
  %v1325 = vsel %vm379, %v1230, 0
  %1327 = vmatprep.subr.mxu0 0.0
  %1328 = vmatpush1.xpose.msra.mxu0 %v1322
  %1329 = vmatprep.subr.mxu0 0.0
  %1330 = vmatpush1.xpose.msra.mxu0 %v1325
  %1331 = vmatprep.subr.mxu0 0.0
  %1332 = vmatpush1.xpose.msra.mxu0 0.0
  %1333 = vmatprep.subr.mxu0 0.0
  %1334 = vmatpush1.xpose.msra.mxu0 0.0
  %1335 = vmatprep.subr.mxu0 0.0
  %1336 = vmatpush1.xpose.msra.mxu0 0.0
  %1337 = vmatprep.subr.mxu0 0.0
  %1338 = vmatpush1.xpose.msra.mxu0 0.0
  %1339 = vmatprep.subr.mxu0 0.0
  %1340 = vmatpush1.xpose.msra.mxu0 0.0
  %1341 = vmatprep.subr.mxu0 0.0
  %1342 = vmatpush1.xpose.msra.mxu0 0.0
  %1343 = vmatprep.subr.mxu0 0.0
  %1344 = vmatpush1.xpose.msra.mxu0 0.0
  %1345 = vmatprep.subr.mxu0 0.0
  %1346 = vmatpush1.xpose.msra.mxu0 0.0
  %1347 = vmatprep.subr.mxu0 0.0
  %1348 = vmatpush1.xpose.msra.mxu0 0.0
  %1349 = vmatprep.subr.mxu0 0.0
  %1350 = vmatpush1.xpose.msra.mxu0 0.0
  %1351 = vmatprep.subr.mxu0 0.0
  %1352 = vmatpush1.xpose.msra.mxu0 0.0
  %1353 = vmatprep.subr.mxu0 0.0
  %1354 = vmatpush1.xpose.msra.mxu0 0.0
  %1355 = vmatprep.subr.mxu0 0.0
  %1356 = vmatpush1.xpose.msra.mxu0 0.0
  %1357 = vmatprep.subr.mxu0 0.0
  %1358 = vmatpush1.xpose.msra.mxu0 0.0
  %1359 = vmatprep.subr.mxu0 0.0
  %1360 = vmatpush1.xpose.msra.mxu0 0.0
  %1361 = vmatprep.subr.mxu0 0.0
  %1362 = vmatpush1.xpose.msra.mxu0 0.0
  %1363 = vmatprep.subr.mxu0 0.0
  %1364 = vmatpush1.xpose.msra.mxu0 0.0
  %1365 = vmatprep.subr.mxu0 0.0
  %1366 = vmatpush1.xpose.msra.mxu0 0.0
  %1367 = vmatprep.subr.mxu0 0.0
  %1368 = vmatpush1.xpose.msra.mxu0 0.0
  %1369 = vmatprep.subr.mxu0 0.0
  %1370 = vmatpush1.xpose.msra.mxu0 0.0
  %1371 = vmatprep.subr.mxu0 0.0
  %1372 = vmatpush1.xpose.msra.mxu0 0.0
  %1373 = vmatprep.subr.mxu0 0.0
  %1374 = vmatpush1.xpose.msra.mxu0 0.0
  %1375 = vmatprep.subr.mxu0 0.0
  %1376 = vmatpush1.xpose.msra.mxu0 0.0
  %1377 = vmatprep.subr.mxu0 0.0
  %1378 = vmatpush1.xpose.msra.mxu0 0.0
  %1379 = vmatprep.subr.mxu0 0.0
  %1380 = vmatpush1.xpose.msra.mxu0 0.0
  %1381 = vmatprep.subr.mxu0 0.0
  %1382 = vmatpush1.xpose.msra.mxu0 0.0
  %1383 = vmatprep.subr.mxu0 0.0
  %1384 = vmatpush1.xpose.msra.mxu0 0.0
  %1385 = vmatprep.subr.mxu0 0.0
  %1386 = vmatpush1.xpose.msra.mxu0 0.0
  %1387 = vmatprep.subr.mxu0 0.0
  %1388 = vmatpush1.xpose.msra.mxu0 0.0
  %1389 = vmatprep.subr.mxu0 0.0
  %1390 = vmatpush1.xpose.msra.mxu0 0.0
  %1391 = vmatprep.mubr.f32.mxu0 0.0
  %1392 = vmatmul.mubr.f32.gmra.mrb[0].mxu0 %v474
  %v1393 = vpop.f32.mrb[0].mxu0
  %v1394 = vadd.f32 0.0, %v1393
  %v1395 = vpop.f32.mrb[0].mxu0
  %1396 = vdwg.mxu0
  %v1397 = vlaneseq
  %v1398 = vshrl.u32 %v1397, 7
  %v1399 = vsub.s32 0, %v1398
  %v1400 = vrot.slane %v1318, %v1399
  %v1401 = vadd.f32 %v1233, %v1400
  %v1402 = vadd.f32 %v1236, %v1400
  %v1403 = vlog2.pop %v1401
  %v1404 = vmul.f32 %v1403, 0.6931472
  %v1405 = vlog2.pop %v1402
  %v1406 = vmul.f32 %v1405, 0.6931472
  %v1407 = vmul.f32 %v1404, 0.3
  %v1408 = vmul.f32 %v1406, 0.3
  %v1409 = vadd.f32 %v1221, %v1407
  %v1410 = vadd.f32 %v1222, %v1408
  %v1411 = vlaneseq
  %v1412 = vshrl.u32 %v1411, 7
  %v1413 = vsub.s32 0, %v1412
  %v1414 = vrot.slane %v1394, %v1413
  %v1415 = vadd.f32 %v1243, %v1414
  %v1416 = vadd.f32 %v1244, %v1414
  %v1417 = vrcp.pop %v1401
  %v1418 = vmul.f32 %v1415, %v1417
  %v1419 = vrcp.pop %v1402
  %v1420 = vmul.f32 %v1416, %v1419
  %v1421 = vsub.f32 %v1409, %v1418
  %v1422 = vsub.f32 %v1410, %v1420
  %v1423 = vadd.f32 %v1421, %v168
  %v1424 = vadd.f32 %v1422, %v169
  %v1425 = vsel %vm580, %v1423, -inf
  %1426 = vmax.xlane.f32.xlu0 %v1425
  %v1427 = vpop.xlane.xlu0 %1426
  %v1428 = vsel %vm580, %v1424, -inf
  %1429 = vmax.xlane.f32.xlu0 %v1428
  %v1430 = vpop.xlane.xlu0 %1429
  %v1431 = vsub.f32 %v1423, %v1427
  %v1432 = vsub.f32 %v1424, %v1430
  %v1433 = vmul.f32 %v1431, 1.442695
  %v1434 = vpow.pop %v1433
  %v1435 = vmul.f32 %v1432, 1.442695
  %v1436 = vpow.pop %v1435
  %v1437 = vsel %vm580, %v1434, 0.0
  %1438 = vadd.xlane.f32.xlu0 %v1437
  %v1439 = vpop.xlane.xlu0 %1438
  %v1440 = vsel %vm580, %v1436, 0.0
  %1441 = vadd.xlane.f32.xlu0 %v1440
  %v1442 = vpop.xlane.xlu0 %1441
  %v1443 = vrcp.pop %v1439
  %v1444 = vmul.f32 %v1434, %v1443
  %v1445 = vrcp.pop %v1442
  %v1446 = vmul.f32 %v1436, %v1445
  %1447 = vrot.lane.b32.xlu0 %v1124, 64
  %v1448 = vpop.permute.xlu0 %1447
  %1449 = vrot.lane.b32.xlu0 %v1129, 64
  %v1450 = vpop.permute.xlu0 %1449
  %v1454 = vsel %vm580, %v1444, 0
  %v1457 = vsel %vm580, %v1446, 0
  %1459 = vmatprep.subr.mxu0 0.0
  %1460 = vmatpush1.msra.mxu0 %v1448
  %1461 = vmatprep.subr.mxu0 0.0
  %1462 = vmatpush1.msra.mxu0 %v1450
  %1463 = vmatprep.subr.mxu0 0.0
  %1464 = vmatpush1.msra.mxu0 0.0
  %1465 = vmatprep.subr.mxu0 0.0
  %1466 = vmatpush1.msra.mxu0 0.0
  %1467 = vmatprep.subr.mxu0 0.0
  %1468 = vmatpush1.msra.mxu0 0.0
  %1469 = vmatprep.subr.mxu0 0.0
  %1470 = vmatpush1.msra.mxu0 0.0
  %1471 = vmatprep.subr.mxu0 0.0
  %1472 = vmatpush1.msra.mxu0 0.0
  %1473 = vmatprep.subr.mxu0 0.0
  %1474 = vmatpush1.msra.mxu0 0.0
  %1475 = vmatprep.subr.mxu0 0.0
  %1476 = vmatpush1.msra.mxu0 0.0
  %1477 = vmatprep.subr.mxu0 0.0
  %1478 = vmatpush1.msra.mxu0 0.0
  %1479 = vmatprep.subr.mxu0 0.0
  %1480 = vmatpush1.msra.mxu0 0.0
  %1481 = vmatprep.subr.mxu0 0.0
  %1482 = vmatpush1.msra.mxu0 0.0
  %1483 = vmatprep.subr.mxu0 0.0
  %1484 = vmatpush1.msra.mxu0 0.0
  %1485 = vmatprep.subr.mxu0 0.0
  %1486 = vmatpush1.msra.mxu0 0.0
  %1487 = vmatprep.subr.mxu0 0.0
  %1488 = vmatpush1.msra.mxu0 0.0
  %1489 = vmatprep.subr.mxu0 0.0
  %1490 = vmatpush1.msra.mxu0 0.0
  %1491 = vmatprep.subr.mxu0 0.0
  %1492 = vmatpush1.msra.mxu0 0.0
  %1493 = vmatprep.subr.mxu0 0.0
  %1494 = vmatpush1.msra.mxu0 0.0
  %1495 = vmatprep.subr.mxu0 0.0
  %1496 = vmatpush1.msra.mxu0 0.0
  %1497 = vmatprep.subr.mxu0 0.0
  %1498 = vmatpush1.msra.mxu0 0.0
  %1499 = vmatprep.subr.mxu0 0.0
  %1500 = vmatpush1.msra.mxu0 0.0
  %1501 = vmatprep.subr.mxu0 0.0
  %1502 = vmatpush1.msra.mxu0 0.0
  %1503 = vmatprep.subr.mxu0 0.0
  %1504 = vmatpush1.msra.mxu0 0.0
  %1505 = vmatprep.subr.mxu0 0.0
  %1506 = vmatpush1.msra.mxu0 0.0
  %1507 = vmatprep.subr.mxu0 0.0
  %1508 = vmatpush1.msra.mxu0 0.0
  %1509 = vmatprep.subr.mxu0 0.0
  %1510 = vmatpush1.msra.mxu0 0.0
  %1511 = vmatprep.subr.mxu0 0.0
  %1512 = vmatpush1.msra.mxu0 0.0
  %1513 = vmatprep.subr.mxu0 0.0
  %1514 = vmatpush1.msra.mxu0 0.0
  %1515 = vmatprep.subr.mxu0 0.0
  %1516 = vmatpush1.msra.mxu0 0.0
  %1517 = vmatprep.subr.mxu0 0.0
  %1518 = vmatpush1.msra.mxu0 0.0
  %1519 = vmatprep.subr.mxu0 0.0
  %1520 = vmatpush1.msra.mxu0 0.0
  %1521 = vmatprep.subr.mxu0 0.0
  %1522 = vmatpush1.msra.mxu0 0.0
  %1523 = vmatprep.mubr.f32.mxu0 0.0
  %1524 = vmatmul.mubr.f32.gmra.mrb[0].mxu0 %v1454
  %v1525 = vpop.f32.mrb[0].mxu0
  %v1526 = vadd.f32 0.0, %v1525
  %v1527 = vpop.f32.mrb[0].mxu0
  %1528 = vmatprep.mubr.f32.mxu0 0.0
  %1529 = vmatmul.mubr.f32.gmra.mrb[0].mxu0 %v1457
  %v1530 = vpop.f32.mrb[0].mxu0
  %v1531 = vadd.f32 0.0, %v1530
  %v1532 = vpop.f32.mrb[0].mxu0
  %1533 = vdwg.mxu0
  %v1534 = vlaneseq
  %v1535 = vshrl.u32 %v1534, 7
  %v1536 = vsub.s32 0, %v1535
  %v1537 = vrot.slane %v1041, %v1536
  %v1539 = vsel %vm198, %v1526, 0
  %v1542 = vsel %vm198, %v1531, 0
  %1544 = vmatprep.subr.mxu0 0.0
  %1545 = vmatpush1.msra.mxu0 %v1037
  %1546 = vmatprep.subr.mxu0 0.0
  %1547 = vmatpush1.msra.mxu0 %v1038
  %1548 = vmatprep.subr.mxu0 0.0
  %1549 = vmatpush1.msra.mxu0 %v1039
  %1550 = vmatprep.subr.mxu0 0.0
  %1551 = vmatpush1.msra.mxu0 %v1040
  %1552 = vmatprep.subr.mxu0 0.0
  %1553 = vmatpush1.msra.mxu0 0.0
  %1554 = vmatprep.subr.mxu0 0.0
  %1555 = vmatpush1.msra.mxu0 0.0
  %1556 = vmatprep.subr.mxu0 0.0
  %1557 = vmatpush1.msra.mxu0 0.0
  %1558 = vmatprep.subr.mxu0 0.0
  %1559 = vmatpush1.msra.mxu0 0.0
  %1560 = vmatprep.subr.mxu0 0.0
  %1561 = vmatpush1.msra.mxu0 0.0
  %1562 = vmatprep.subr.mxu0 0.0
  %1563 = vmatpush1.msra.mxu0 0.0
  %1564 = vmatprep.subr.mxu0 0.0
  %1565 = vmatpush1.msra.mxu0 0.0
  %1566 = vmatprep.subr.mxu0 0.0
  %1567 = vmatpush1.msra.mxu0 0.0
  %1568 = vmatprep.subr.mxu0 0.0
  %1569 = vmatpush1.msra.mxu0 0.0
  %1570 = vmatprep.subr.mxu0 0.0
  %1571 = vmatpush1.msra.mxu0 0.0
  %1572 = vmatprep.subr.mxu0 0.0
  %1573 = vmatpush1.msra.mxu0 0.0
  %1574 = vmatprep.subr.mxu0 0.0
  %1575 = vmatpush1.msra.mxu0 0.0
  %1576 = vmatprep.subr.mxu0 0.0
  %1577 = vmatpush1.msra.mxu0 0.0
  %1578 = vmatprep.subr.mxu0 0.0
  %1579 = vmatpush1.msra.mxu0 0.0
  %1580 = vmatprep.subr.mxu0 0.0
  %1581 = vmatpush1.msra.mxu0 0.0
  %1582 = vmatprep.subr.mxu0 0.0
  %1583 = vmatpush1.msra.mxu0 0.0
  %1584 = vmatprep.subr.mxu0 0.0
  %1585 = vmatpush1.msra.mxu0 0.0
  %1586 = vmatprep.subr.mxu0 0.0
  %1587 = vmatpush1.msra.mxu0 0.0
  %1588 = vmatprep.subr.mxu0 0.0
  %1589 = vmatpush1.msra.mxu0 0.0
  %1590 = vmatprep.subr.mxu0 0.0
  %1591 = vmatpush1.msra.mxu0 0.0
  %1592 = vmatprep.subr.mxu0 0.0
  %1593 = vmatpush1.msra.mxu0 0.0
  %1594 = vmatprep.subr.mxu0 0.0
  %1595 = vmatpush1.msra.mxu0 0.0
  %1596 = vmatprep.subr.mxu0 0.0
  %1597 = vmatpush1.msra.mxu0 0.0
  %1598 = vmatprep.subr.mxu0 0.0
  %1599 = vmatpush1.msra.mxu0 0.0
  %1600 = vmatprep.subr.mxu0 0.0
  %1601 = vmatpush1.msra.mxu0 0.0
  %1602 = vmatprep.subr.mxu0 0.0
  %1603 = vmatpush1.msra.mxu0 0.0
  %1604 = vmatprep.subr.mxu0 0.0
  %1605 = vmatpush1.msra.mxu0 0.0
  %1606 = vmatprep.subr.mxu0 0.0
  %1607 = vmatpush1.msra.mxu0 0.0
  %1608 = vmatprep.mubr.f32.mxu0 0.0
  %1609 = vmatmul.mubr.f32.gmra.mrb[0].mxu0 %v1539
  %v1610 = vpop.f32.mrb[0].mxu0
  %v1611 = vadd.f32 %v1537, %v1610
  %v1612 = vpop.f32.mrb[0].mxu0
  %1613 = vmatprep.mubr.f32.mxu0 0.0
  %1614 = vmatmul.mubr.f32.gmra.mrb[0].mxu0 %v1542
  %v1615 = vpop.f32.mrb[0].mxu0
  %v1616 = vadd.f32 %v1537, %v1615
  %v1617 = vpop.f32.mrb[0].mxu0
  %1618 = vdwg.mxu0
  %v1619 = vadd.f32 %v1020, %v1611
  %v1620 = vadd.f32 %v1021, %v1616
  %v1621 = vsel %vm198, %v1619, 0.0
  %1622 = vadd.xlane.f32.xlu0 %v1621
  %v1623 = vpop.xlane.xlu0 %1622
  %v1624 = vsel %vm198, %v1620, 0.0
  %1625 = vadd.xlane.f32.xlu0 %v1624
  %v1626 = vpop.xlane.xlu0 %1625
  %v1627 = vmul.f32 %v1623, %v783
  %v1628 = vmul.f32 %v1626, %v783
  %v1629 = vsub.f32 %v1619, %v1627
  %v1630 = vsub.f32 %v1620, %v1628
  %v1631 = vmul.f32 %v1629, %v1629
  %v1632 = vmul.f32 %v1630, %v1630
  %v1633 = vsel %vm198, %v1631, 0.0
  %1634 = vadd.xlane.f32.xlu0 %v1633
  %v1635 = vpop.xlane.xlu0 %1634
  %v1636 = vsel %vm198, %v1632, 0.0
  %1637 = vadd.xlane.f32.xlu0 %v1636
  %v1638 = vpop.xlane.xlu0 %1637
  %v1639 = vmul.f32 %v1635, %v783
  %v1640 = vmul.f32 %v1638, %v783
  %v1641 = vadd.f32 %v1639, 1e-05
  %v1642 = vadd.f32 %v1640, 1e-05
  %v1643 = vrsqrt.pop %v1641
  %v1644 = vrsqrt.pop %v1642
  %v1645 = vmul.f32 %v1629, %v1643
  %v1646 = vmul.f32 %v1630, %v1644
  %v1647 = vlaneseq
  %v1648 = vshrl.u32 %v1647, 7
  %v1649 = vsub.s32 0, %v1648
  %v1650 = vrot.slane %v1043, %v1649
  %v1651 = vmul.f32 %v1645, %v1650
  %v1652 = vmul.f32 %v1646, %v1650
  %v1653 = vlaneseq
  %v1654 = vshrl.u32 %v1653, 7
  %v1655 = vsub.s32 0, %v1654
  %v1656 = vrot.slane %v1044, %v1655
  %v1657 = vadd.f32 %v1651, %v1656
  %v1658 = vadd.f32 %v1652, %v1656
  %v1659 = vlaneseq
  %v1660 = vshrl.u32 %v1659, 7
  %v1661 = vsub.s32 0, %v1660
  %v1662 = vrot.slane %v1036, %v1661
  %v1664 = vsel %vm198, %v1657, 0
  %v1667 = vsel %vm198, %v1658, 0
  %1669 = vmatprep.subr.mxu0 0.0
  %1670 = vmatpush1.msra.mxu0 %v1027
  %1671 = vmatprep.subr.mxu0 0.0
  %1672 = vmatpush1.msra.mxu0 %v1028
  %1673 = vmatprep.subr.mxu0 0.0
  %1674 = vmatpush1.msra.mxu0 %v1029
  %1675 = vmatprep.subr.mxu0 0.0
  %1676 = vmatpush1.msra.mxu0 %v1030
  %1677 = vmatprep.subr.mxu0 0.0
  %1678 = vmatpush1.msra.mxu0 0.0
  %1679 = vmatprep.subr.mxu0 0.0
  %1680 = vmatpush1.msra.mxu0 0.0
  %1681 = vmatprep.subr.mxu0 0.0
  %1682 = vmatpush1.msra.mxu0 0.0
  %1683 = vmatprep.subr.mxu0 0.0
  %1684 = vmatpush1.msra.mxu0 0.0
  %1685 = vmatprep.subr.mxu0 0.0
  %1686 = vmatpush1.msra.mxu0 0.0
  %1687 = vmatprep.subr.mxu0 0.0
  %1688 = vmatpush1.msra.mxu0 0.0
  %1689 = vmatprep.subr.mxu0 0.0
  %1690 = vmatpush1.msra.mxu0 0.0
  %1691 = vmatprep.subr.mxu0 0.0
  %1692 = vmatpush1.msra.mxu0 0.0
  %1693 = vmatprep.subr.mxu0 0.0
  %1694 = vmatpush1.msra.mxu0 0.0
  %1695 = vmatprep.subr.mxu0 0.0
  %1696 = vmatpush1.msra.mxu0 0.0
  %1697 = vmatprep.subr.mxu0 0.0
  %1698 = vmatpush1.msra.mxu0 0.0
  %1699 = vmatprep.subr.mxu0 0.0
  %1700 = vmatpush1.msra.mxu0 0.0
  %1701 = vmatprep.subr.mxu0 0.0
  %1702 = vmatpush1.msra.mxu0 0.0
  %1703 = vmatprep.subr.mxu0 0.0
  %1704 = vmatpush1.msra.mxu0 0.0
  %1705 = vmatprep.subr.mxu0 0.0
  %1706 = vmatpush1.msra.mxu0 0.0
  %1707 = vmatprep.subr.mxu0 0.0
  %1708 = vmatpush1.msra.mxu0 0.0
  %1709 = vmatprep.subr.mxu0 0.0
  %1710 = vmatpush1.msra.mxu0 0.0
  %1711 = vmatprep.subr.mxu0 0.0
  %1712 = vmatpush1.msra.mxu0 0.0
  %1713 = vmatprep.subr.mxu0 0.0
  %1714 = vmatpush1.msra.mxu0 0.0
  %1715 = vmatprep.subr.mxu0 0.0
  %1716 = vmatpush1.msra.mxu0 0.0
  %1717 = vmatprep.subr.mxu0 0.0
  %1718 = vmatpush1.msra.mxu0 0.0
  %1719 = vmatprep.subr.mxu0 0.0
  %1720 = vmatpush1.msra.mxu0 0.0
  %1721 = vmatprep.subr.mxu0 0.0
  %1722 = vmatpush1.msra.mxu0 0.0
  %1723 = vmatprep.subr.mxu0 0.0
  %1724 = vmatpush1.msra.mxu0 0.0
  %1725 = vmatprep.subr.mxu0 0.0
  %1726 = vmatpush1.msra.mxu0 0.0
  %1727 = vmatprep.subr.mxu0 0.0
  %1728 = vmatpush1.msra.mxu0 0.0
  %1729 = vmatprep.subr.mxu0 0.0
  %1730 = vmatpush1.msra.mxu0 0.0
  %1731 = vmatprep.subr.mxu0 0.0
  %1732 = vmatpush1.msra.mxu0 0.0
  %1733 = vmatprep.mubr.f32.mxu0 0.0
  %1734 = vmatmul.mubr.f32.gmra.mrb[0].mxu0 %v1664
  %v1735 = vpop.f32.mrb[0].mxu0
  %v1736 = vadd.f32 %v1662, %v1735
  %v1737 = vpop.f32.mrb[0].mxu0
  %1738 = vmatprep.mubr.f32.mxu0 0.0
  %1739 = vmatmul.mubr.f32.gmra.mrb[0].mxu0 %v1667
  %v1740 = vpop.f32.mrb[0].mxu0
  %v1741 = vadd.f32 %v1662, %v1740
  %v1742 = vpop.f32.mrb[0].mxu0
  %1743 = vdwg.mxu0
  %v1744 = vmax.f32 %v1736, 0.0
  %v1745 = vmax.f32 %v1741, 0.0
  %v1746 = vlaneseq
  %v1747 = vshrl.u32 %v1746, 7
  %v1748 = vsub.s32 0, %v1747
  %v1749 = vrot.slane %v1042, %v1748
  %1750 = vmatprep.subr.mxu0 0.0
  %1751 = vmatpush1.xpose.msra.mxu0 %v1031
  %1752 = vmatprep.subr.mxu0 0.0
  %1753 = vmatpush1.xpose.msra.mxu0 %v1032
  %1754 = vmatprep.subr.mxu0 0.0
  %1755 = vmatpush1.xpose.msra.mxu0 %v1033
  %1756 = vmatprep.subr.mxu0 0.0
  %1757 = vmatpush1.xpose.msra.mxu0 %v1034
  %1758 = vmatprep.subr.mxu0 0.0
  %1759 = vmatpush1.xpose.msra.mxu0 0.0
  %1760 = vmatprep.subr.mxu0 0.0
  %1761 = vmatpush1.xpose.msra.mxu0 0.0
  %1762 = vmatprep.subr.mxu0 0.0
  %1763 = vmatpush1.xpose.msra.mxu0 0.0
  %1764 = vmatprep.subr.mxu0 0.0
  %1765 = vmatpush1.xpose.msra.mxu0 0.0
  %1766 = vmatprep.subr.mxu0 0.0
  %1767 = vmatpush1.xpose.msra.mxu0 0.0
  %1768 = vmatprep.subr.mxu0 0.0
  %1769 = vmatpush1.xpose.msra.mxu0 0.0
  %1770 = vmatprep.subr.mxu0 0.0
  %1771 = vmatpush1.xpose.msra.mxu0 0.0
  %1772 = vmatprep.subr.mxu0 0.0
  %1773 = vmatpush1.xpose.msra.mxu0 0.0
  %1774 = vmatprep.subr.mxu0 0.0
  %1775 = vmatpush1.xpose.msra.mxu0 0.0
  %1776 = vmatprep.subr.mxu0 0.0
  %1777 = vmatpush1.xpose.msra.mxu0 0.0
  %1778 = vmatprep.subr.mxu0 0.0
  %1779 = vmatpush1.xpose.msra.mxu0 0.0
  %1780 = vmatprep.subr.mxu0 0.0
  %1781 = vmatpush1.xpose.msra.mxu0 0.0
  %1782 = vmatprep.subr.mxu0 0.0
  %1783 = vmatpush1.xpose.msra.mxu0 0.0
  %1784 = vmatprep.subr.mxu0 0.0
  %1785 = vmatpush1.xpose.msra.mxu0 0.0
  %1786 = vmatprep.subr.mxu0 0.0
  %1787 = vmatpush1.xpose.msra.mxu0 0.0
  %1788 = vmatprep.subr.mxu0 0.0
  %1789 = vmatpush1.xpose.msra.mxu0 0.0
  %1790 = vmatprep.subr.mxu0 0.0
  %1791 = vmatpush1.xpose.msra.mxu0 0.0
  %1792 = vmatprep.subr.mxu0 0.0
  %1793 = vmatpush1.xpose.msra.mxu0 0.0
  %1794 = vmatprep.subr.mxu0 0.0
  %1795 = vmatpush1.xpose.msra.mxu0 0.0
  %1796 = vmatprep.subr.mxu0 0.0
  %1797 = vmatpush1.xpose.msra.mxu0 0.0
  %1798 = vmatprep.subr.mxu0 0.0
  %1799 = vmatpush1.xpose.msra.mxu0 0.0
  %1800 = vmatprep.subr.mxu0 0.0
  %1801 = vmatpush1.xpose.msra.mxu0 0.0
  %1802 = vmatprep.subr.mxu0 0.0
  %1803 = vmatpush1.xpose.msra.mxu0 0.0
  %1804 = vmatprep.subr.mxu0 0.0
  %1805 = vmatpush1.xpose.msra.mxu0 0.0
  %1806 = vmatprep.subr.mxu0 0.0
  %1807 = vmatpush1.xpose.msra.mxu0 0.0
  %1808 = vmatprep.subr.mxu0 0.0
  %1809 = vmatpush1.xpose.msra.mxu0 0.0
  %1810 = vmatprep.subr.mxu0 0.0
  %1811 = vmatpush1.xpose.msra.mxu0 0.0
  %1812 = vmatprep.subr.mxu0 0.0
  %1813 = vmatpush1.xpose.msra.mxu0 0.0
  %1814 = vmatprep.mubr.f32.mxu0 0.0
  %1815 = vmatmul.mubr.f32.gmra.mrb[0].mxu0 %v1744
  %v1816 = vpop.f32.mrb[0].mxu0
  %v1817 = vadd.f32 %v1749, %v1816
  %v1818 = vpop.f32.mrb[0].mxu0
  %1819 = vmatprep.mubr.f32.mxu0 0.0
  %1820 = vmatmul.mubr.f32.gmra.mrb[0].mxu0 %v1745
  %v1821 = vpop.f32.mrb[0].mxu0
  %v1822 = vadd.f32 %v1749, %v1821
  %v1823 = vpop.f32.mrb[0].mxu0
  %1824 = vdwg.mxu0
  %v1825 = vadd.f32 %v1657, %v1817
  %v1826 = vadd.f32 %v1658, %v1822
  %v1827 = vsel %vm198, %v1825, 0.0
  %1828 = vadd.xlane.f32.xlu0 %v1827
  %v1829 = vpop.xlane.xlu0 %1828
  %v1830 = vsel %vm198, %v1826, 0.0
  %1831 = vadd.xlane.f32.xlu0 %v1830
  %v1832 = vpop.xlane.xlu0 %1831
  %v1833 = vmul.f32 %v1829, %v783
  %v1834 = vmul.f32 %v1832, %v783
  %v1835 = vsub.f32 %v1825, %v1833
  %v1836 = vsub.f32 %v1826, %v1834
  %v1837 = vmul.f32 %v1835, %v1835
  %v1838 = vmul.f32 %v1836, %v1836
  %v1839 = vsel %vm198, %v1837, 0.0
  %1840 = vadd.xlane.f32.xlu0 %v1839
  %v1841 = vpop.xlane.xlu0 %1840
  %v1842 = vsel %vm198, %v1838, 0.0
  %1843 = vadd.xlane.f32.xlu0 %v1842
  %v1844 = vpop.xlane.xlu0 %1843
  %v1845 = vmul.f32 %v1841, %v783
  %v1846 = vmul.f32 %v1844, %v783
  %v1847 = vadd.f32 %v1845, 1e-05
  %v1848 = vadd.f32 %v1846, 1e-05
  %v1849 = vrsqrt.pop %v1847
  %v1850 = vrsqrt.pop %v1848
  %v1851 = vmul.f32 %v1835, %v1849
  %v1852 = vmul.f32 %v1836, %v1850
  %v1853 = vlaneseq
  %v1854 = vshrl.u32 %v1853, 7
  %v1855 = vsub.s32 0, %v1854
  %v1856 = vrot.slane %v1045, %v1855
  %v1857 = vmul.f32 %v1851, %v1856
  %v1858 = vmul.f32 %v1852, %v1856
  %v1859 = vlaneseq
  %v1860 = vshrl.u32 %v1859, 7
  %v1861 = vsub.s32 0, %v1860
  %v1862 = vrot.slane %v1046, %v1861
  %v1863 = vadd.f32 %v1857, %v1862
  %v1864 = vadd.f32 %v1858, %v1862
  %v1865 = vsel %vm198, %v1863, 0.0
  %1866 = vadd.xlane.f32.xlu0 %v1865
  %v1867 = vpop.xlane.xlu0 %1866
  %v1868 = vsel %vm198, %v1864, 0.0
  %1869 = vadd.xlane.f32.xlu0 %v1868
  %v1870 = vpop.xlane.xlu0 %1869
  %v1871 = vmul.f32 %v1867, %v783
  %v1872 = vmul.f32 %v1870, %v783
  %v1873 = vsub.f32 %v1863, %v1871
  %v1874 = vsub.f32 %v1864, %v1872
  %v1875 = vmul.f32 %v1873, %v1873
  %v1876 = vmul.f32 %v1874, %v1874
  %v1877 = vsel %vm198, %v1875, 0.0
  %1878 = vadd.xlane.f32.xlu0 %v1877
  %v1879 = vpop.xlane.xlu0 %1878
  %v1880 = vsel %vm198, %v1876, 0.0
  %1881 = vadd.xlane.f32.xlu0 %v1880
  %v1882 = vpop.xlane.xlu0 %1881
  %v1883 = vmul.f32 %v1879, %v783
  %v1884 = vmul.f32 %v1882, %v783
  %v1885 = vadd.f32 %v1883, 1e-05
  %v1886 = vadd.f32 %v1884, 1e-05
  %v1887 = vrsqrt.pop %v1885
  %v1888 = vrsqrt.pop %v1886
  %v1889 = vmul.f32 %v1873, %v1887
  %v1890 = vmul.f32 %v1874, %v1888
  %v1891 = vlaneseq
  %v1892 = vshrl.u32 %v1891, 7
  %v1893 = vsub.s32 0, %v1892
  %v1894 = vrot.slane %v51, %v1893
  %v1895 = vmul.f32 %v1889, %v1894
  %v1896 = vmul.f32 %v1890, %v1894
  %v1897 = vlaneseq
  %v1898 = vshrl.u32 %v1897, 7
  %v1899 = vsub.s32 0, %v1898
  %v1900 = vrot.slane %v52, %v1899
  %v1901 = vadd.f32 %v1895, %v1900
  %v1902 = vadd.f32 %v1896, %v1900
  %v1903 = vlaneseq
  %v1904 = vshrl.u32 %v1903, 7
  %v1905 = vsub.s32 0, %v1904
  %v1906 = vrot.slane %v57, %v1905
  %v1908 = vsel %vm198, %v1901, 0
  %v1911 = vsel %vm198, %v1902, 0
  %1913 = vmatprep.subr.mxu0 0.0
  %1914 = vmatpush1.msra.mxu0 %v53
  %1915 = vmatprep.subr.mxu0 0.0
  %1916 = vmatpush1.msra.mxu0 %v54
  %1917 = vmatprep.subr.mxu0 0.0
  %1918 = vmatpush1.msra.mxu0 %v55
  %1919 = vmatprep.subr.mxu0 0.0
  %1920 = vmatpush1.msra.mxu0 %v56
  %1921 = vmatprep.subr.mxu0 0.0
  %1922 = vmatpush1.msra.mxu0 0.0
  %1923 = vmatprep.subr.mxu0 0.0
  %1924 = vmatpush1.msra.mxu0 0.0
  %1925 = vmatprep.subr.mxu0 0.0
  %1926 = vmatpush1.msra.mxu0 0.0
  %1927 = vmatprep.subr.mxu0 0.0
  %1928 = vmatpush1.msra.mxu0 0.0
  %1929 = vmatprep.subr.mxu0 0.0
  %1930 = vmatpush1.msra.mxu0 0.0
  %1931 = vmatprep.subr.mxu0 0.0
  %1932 = vmatpush1.msra.mxu0 0.0
  %1933 = vmatprep.subr.mxu0 0.0
  %1934 = vmatpush1.msra.mxu0 0.0
  %1935 = vmatprep.subr.mxu0 0.0
  %1936 = vmatpush1.msra.mxu0 0.0
  %1937 = vmatprep.subr.mxu0 0.0
  %1938 = vmatpush1.msra.mxu0 0.0
  %1939 = vmatprep.subr.mxu0 0.0
  %1940 = vmatpush1.msra.mxu0 0.0
  %1941 = vmatprep.subr.mxu0 0.0
  %1942 = vmatpush1.msra.mxu0 0.0
  %1943 = vmatprep.subr.mxu0 0.0
  %1944 = vmatpush1.msra.mxu0 0.0
  %1945 = vmatprep.subr.mxu0 0.0
  %1946 = vmatpush1.msra.mxu0 0.0
  %1947 = vmatprep.subr.mxu0 0.0
  %1948 = vmatpush1.msra.mxu0 0.0
  %1949 = vmatprep.subr.mxu0 0.0
  %1950 = vmatpush1.msra.mxu0 0.0
  %1951 = vmatprep.subr.mxu0 0.0
  %1952 = vmatpush1.msra.mxu0 0.0
  %1953 = vmatprep.subr.mxu0 0.0
  %1954 = vmatpush1.msra.mxu0 0.0
  %1955 = vmatprep.subr.mxu0 0.0
  %1956 = vmatpush1.msra.mxu0 0.0
  %1957 = vmatprep.subr.mxu0 0.0
  %1958 = vmatpush1.msra.mxu0 0.0
  %1959 = vmatprep.subr.mxu0 0.0
  %1960 = vmatpush1.msra.mxu0 0.0
  %1961 = vmatprep.subr.mxu0 0.0
  %1962 = vmatpush1.msra.mxu0 0.0
  %1963 = vmatprep.subr.mxu0 0.0
  %1964 = vmatpush1.msra.mxu0 0.0
  %1965 = vmatprep.subr.mxu0 0.0
  %1966 = vmatpush1.msra.mxu0 0.0
  %1967 = vmatprep.subr.mxu0 0.0
  %1968 = vmatpush1.msra.mxu0 0.0
  %1969 = vmatprep.subr.mxu0 0.0
  %1970 = vmatpush1.msra.mxu0 0.0
  %1971 = vmatprep.subr.mxu0 0.0
  %1972 = vmatpush1.msra.mxu0 0.0
  %1973 = vmatprep.subr.mxu0 0.0
  %1974 = vmatpush1.msra.mxu0 0.0
  %1975 = vmatprep.subr.mxu0 0.0
  %1976 = vmatpush1.msra.mxu0 0.0
  %1977 = vmatprep.mubr.f32.mxu0 0.0
  %1978 = vmatmul.mubr.f32.gmra.mrb[0].mxu0 %v1908
  %v1979 = vpop.f32.mrb[0].mxu0
  %v1980 = vadd.f32 %v1906, %v1979
  %v1981 = vpop.f32.mrb[0].mxu0
  %1982 = vmatprep.mubr.f32.mxu0 0.0
  %1983 = vmatmul.mubr.f32.gmra.mrb[0].mxu0 %v1911
  %v1984 = vpop.f32.mrb[0].mxu0
  %v1985 = vadd.f32 %v1906, %v1984
  %v1986 = vpop.f32.mrb[0].mxu0
  %1987 = vdwg.mxu0
  %1988 = vst [vmem:[%s4] sm:$0xff] %v1980
  %1989 = vst [vmem:[%s4 + $0x8] sm:$0xff] %v1985
  // Predicated region
  $region18: #{qvit_forward.1} parent=0 // pred_check
    _
  $region19: #{qvit_forward.1} parent=0 // pred_check_branch
    %1991 = sbr.rel (0) target = $region21
  $region20: #{qvit_forward.1} parent=0 // pred_region
    _
  $region21: #{qvit_forward.1} parent=0 // pred_fallthru
    _
  // Predicated region
  $region22: #{qvit_forward.1} parent=0 // pred_check
    _
  $region23: #{qvit_forward.1} parent=0 // pred_check_branch
    %1993 = sbr.rel (0) target = $region25
  $region24: #{qvit_forward.1} parent=0 // pred_region
    _
  $region25: #{qvit_forward.1} parent=0 // pred_fallthru
    _

</llo_original>
